<compile_context>
chip_gen: v7x
topology: tpu7x:2x2x1
jax: 0.10.0
libtpu: 0.0.40
codegen_flags: <defaults>
</compile_context>

<pallas_src>
import numpy as np
import jax
import jax.numpy as jnp
from jax import lax
from jax.experimental import pallas as pl
from jax.experimental.pallas import tpu as pltpu


# ----------------------------------------------------------------------------
# 1-D linear operators for adaptive average pool / bilinear upsample
# ----------------------------------------------------------------------------
def _adaptive_avg_pool_matrix(in_size: int, out_size: int) -> np.ndarray:
    """P (out_size, in_size) such that pooled = P @ x (PyTorch AdaptiveAvgPool1d)."""
    P = np.zeros((out_size, in_size), dtype=np.float32)
    for i in range(out_size):
        start = (i * in_size) // out_size
        end = -(-((i + 1) * in_size) // out_size)  # ceil
        P[i, start:end] = 1.0 / (end - start)
    return P


def _bilinear_upsample_matrix(in_size: int, out_size: int) -> np.ndarray:
    """U (out_size, in_size) such that up = U @ y (bilinear, align_corners=True)."""
    U = np.zeros((out_size, in_size), dtype=np.float32)
    if in_size == 1:
        U[:, 0] = 1.0
        return U
    scale = (in_size - 1) / (out_size - 1)
    for h in range(out_size):
        src = h * scale
        i0 = min(int(np.floor(src)), in_size - 1)
        i1 = min(i0 + 1, in_size - 1)
        frac = src - i0
        U[h, i0] += 1.0 - frac
        U[h, i1] += frac
    return U


# ----------------------------------------------------------------------------
# Hardware-aware sizing helpers
# ----------------------------------------------------------------------------
def _vmem_capacity_bytes() -> int:
    try:
        return int(pltpu.get_tpu_info().vmem_capacity_bytes)
    except Exception:
        return 64 * 1024 * 1024  # conservative fallback (v7x-sized)


def _pick_tile_hw(HW, per_tile_bytes, budget):
    """Largest HW tile (multiple of 128 or full HW) whose per-step VMEM fits."""
    cands = []
    for c in (HW, 8192, 4096, 2048, 1024, 512, 256, 128):
        if c <= HW and HW % c == 0 and c not in cands:
            cands.append(c)
    for c in cands:
        if per_tile_bytes(c) <= budget:
            return c
    return cands[-1]


# ----------------------------------------------------------------------------
# Kernel A: stream x once per (batch, channel-chunk); write the identity slab
#           of the output and accumulate stacked pooled^T for all branches.
#   grid = (B, NC, K)   K = HW // tile_hw  (reduction -> "arbitrary")
# ----------------------------------------------------------------------------
def _pool_identity_kernel(x_ref, poolT_ref, out_id_ref, pooled_ref, acc_ref):
    k = pl.program_id(2)

    @pl.when(k == 0)
    def _init():
        acc_ref[...] = jnp.zeros_like(acc_ref)

    x = x_ref[0]                                            # (Cc, tile_hw)
    out_id_ref[0] = x.astype(out_id_ref.dtype)              # identity slab (only x read)
    acc_ref[...] += jnp.dot(x, poolT_ref[...],
                            preferred_element_type=jnp.float32)

    @pl.when(k == pl.num_programs(2) - 1)
    def _finalize():
        pooled_ref[0] = acc_ref[...].astype(pooled_ref.dtype)


# ----------------------------------------------------------------------------
# Kernel C: stacked bilinear upsample of all branches into the branch slab of
#           the (aliased) concatenated output.  x is NOT re-read.
#   grid = (B, K), fully parallel.
# ----------------------------------------------------------------------------
def _upsample_kernel(alias_ref, yT_ref, upT_ref, out_br_ref):
    del alias_ref  # aliased full-output buffer; identity slab written by kernel A
    up = jnp.dot(yT_ref[0], upT_ref[...], preferred_element_type=jnp.float32)
    out_br_ref[0] = up.astype(out_br_ref.dtype)


# ----------------------------------------------------------------------------
# Builder: precompute constants once per (H, W, pool_sizes, params), return a
# jitted forward(x_nchw) -> out_nchw (= torch.cat([x, up1..up4], dim=1)).
# ----------------------------------------------------------------------------
def build_pyramid_pooling(H, W, C, pool_sizes, params, tile_hw=None,
                          c_split=None, compute_dtype=jnp.float32):
    HW = H * W
    n_br = len(pool_sizes)
    assert C % n_br == 0 and C % 8 == 0, (C, n_br)
    Co = C // n_br
    CO4 = n_br * Co                                   # == C
    ss_sizes = [s * s for s in pool_sizes]
    SS = sum(ss_sizes)
    SS_pad = -(-SS // 8) * 8                          # round up to sublane multiple
    starts = np.cumsum([0] + ss_sizes)[:-1].tolist()  # branch column offsets

    # Stacked pooling / upsample operators (kron of the 1-D operators),
    # transposed for the channel-major (B, C, HW) layout.
    pool_blocks, up_blocks = [], []
    for s in pool_sizes:
        ph = _adaptive_avg_pool_matrix(H, s)
        pw = _adaptive_avg_pool_matrix(W, s)
        uh = _bilinear_upsample_matrix(s, H)
        uw = _bilinear_upsample_matrix(s, W)
        pool_blocks.append(np.kron(ph, pw))           # (s*s, HW)
        up_blocks.append(np.kron(uh, uw))             # (HW, s*s)
    poolT = np.zeros((HW, SS_pad), np.float32)        # pooled^T = x(C,HW) @ poolT
    poolT[:, :SS] = np.concatenate(pool_blocks, axis=0).T
    upT = np.zeros((SS_pad, HW), np.float32)          # branch out = y^T @ upT
    upT[:SS, :] = np.concatenate(up_blocks, axis=1).T

    # Stacked (transposed) conv weights / folded-BN scale & shift (branch-major).
    wT = np.concatenate([np.asarray(p[0]).T for p in params], axis=0)     # (CO4, C)
    scale = np.concatenate([np.asarray(p[1]) for p in params]).reshape(CO4, 1)
    shift = np.concatenate([np.asarray(p[2]) for p in params]).reshape(CO4, 1)

    cdt = np.dtype(compute_dtype)
    bpe = cdt.itemsize
    poolT = jnp.asarray(poolT, dtype=cdt)
    upT = jnp.asarray(upT, dtype=cdt)
    wT = jnp.asarray(wT, dtype=cdt)
    scale = jnp.asarray(scale, jnp.float32)            # tiny -> keep f32
    shift = jnp.asarray(shift, jnp.float32)

    vmem_cap = _vmem_capacity_bytes()
    vmem_limit = int(vmem_cap * 0.8)                    # ~51 MiB v7x, ~102 MiB v5e/v6e
    budget = int(vmem_cap * 0.55)                       # per-kernel streamed-tile budget

    # Tiny per-batch 1x1 conv + folded BN + ReLU + block-diagonal mask kernel.
    # Keeping the big (CO4, C) weight here (instead of the streaming kernel)
    # means it is never a large double-buffered resident in a bandwidth kernel.
    def _conv_bn_relu_kernel(pooled_ref, wT_ref, scale_ref, shift_ref, yT_ref):
        y = jnp.dot(wT_ref[...], pooled_ref[0],
                    preferred_element_type=jnp.float32)          # (CO4, SS_pad)
        y = jnp.maximum(y * scale_ref[...] + shift_ref[...], 0.0)
        # block-diagonal mask from iota: output channels of branch b only see
        # pooled columns of branch b; padded columns are zeroed explicitly.
        row = lax.broadcasted_iota(jnp.int32, y.shape, 0)
        col = lax.broadcasted_iota(jnp.int32, y.shape, 1)
        row_b = jnp.zeros_like(row)
        col_b = jnp.zeros_like(col)
        for b in range(1, n_br):
            row_b = row_b + (row >= b * Co).astype(jnp.int32)
            col_b = col_b + (col >= starts[b]).astype(jnp.int32)
        keep = (row_b == col_b) & (col < SS)
        yT_ref[0] = jnp.where(keep, y, 0.0).astype(yT_ref.dtype)

    @jax.jit
    def forward(x_nchw):
        B = x_nchw.shape[0]
        x = x_nchw.astype(cdt).reshape(B, C, HW)        # free reshape (no transpose)

        # Channel-split grid axis so both v7x TensorCores are busy when the only
        # other parallel axis (B) cannot be split evenly.  Harmless elsewhere.
        nc = c_split if c_split is not None else (
            2 if (B % 2 == 1 and C % 16 == 0) else 1)
        assert C % nc == 0 and (C // nc) % 8 == 0, (C, nc)
        Cc = C // nc

        # Per-kernel tile sizes (the two streaming kernels have different
        # per-tile footprints, so they get independent tiles).
        if tile_hw is not None:
            tile_a = tile_c = tile_hw
        else:
            per_a = lambda t: 2 * t * Cc * bpe + 2 * t * Cc * bpe + 2 * t * SS_pad * bpe
            per_c = lambda t: 2 * t * CO4 * bpe + 2 * t * SS_pad * bpe
            tile_a = _pick_tile_hw(HW, per_a, budget)
            tile_c = _pick_tile_hw(HW, per_c, budget)
        assert HW % tile_a == 0 and HW % tile_c == 0, (HW, tile_a, tile_c)
        ka, kc = HW // tile_a, HW // tile_c

        # ---- Kernel A: identity slab + stacked pooled^T (single pass over x) ----
        out_part, pooled = pl.pallas_call(
            _pool_identity_kernel,
            out_shape=(jax.ShapeDtypeStruct((B, 2 * C, HW), cdt),
                       jax.ShapeDtypeStruct((B, C, SS_pad), jnp.float32)),
            grid_spec=pltpu.PrefetchScalarGridSpec(
                num_scalar_prefetch=0,
                grid=(B, nc, ka),
                in_specs=[
                    pl.BlockSpec((1, Cc, tile_a), lambda b, c, k: (b, c, k)),
                    pl.BlockSpec((tile_a, SS_pad), lambda b, c, k: (k, 0)),
                ],
                out_specs=[
                    pl.BlockSpec((1, Cc, tile_a), lambda b, c, k: (b, c, k)),
                    pl.BlockSpec((1, Cc, SS_pad), lambda b, c, k: (b, c, 0)),
                ],
                scratch_shapes=[pltpu.VMEM((Cc, SS_pad), jnp.float32)],
            ),
            compiler_params=pltpu.CompilerParams(
                dimension_semantics=("parallel", "parallel", "arbitrary"),
                vmem_limit_bytes=vmem_limit),
        )(x, poolT)

        # ---- Kernel B: tiny per-batch conv + BN + ReLU (block-diagonal) ----
        yT = pl.pallas_call(
            _conv_bn_relu_kernel,
            out_shape=jax.ShapeDtypeStruct((B, CO4, SS_pad), jnp.float32),
            grid_spec=pltpu.PrefetchScalarGridSpec(
                num_scalar_prefetch=0,
                grid=(B,),
                in_specs=[
                    pl.BlockSpec((1, C, SS_pad), lambda b: (b, 0, 0)),
                    pl.BlockSpec((CO4, C), lambda b: (0, 0)),
                    pl.BlockSpec((CO4, 1), lambda b: (0, 0)),
                    pl.BlockSpec((CO4, 1), lambda b: (0, 0)),
                ],
                out_specs=pl.BlockSpec((1, CO4, SS_pad), lambda b: (b, 0, 0)),
            ),
            compiler_params=pltpu.CompilerParams(
                dimension_semantics=("parallel",),
                vmem_limit_bytes=vmem_limit),
        )(pooled, wT, scale, shift)

        # ---- Kernel C: upsample all branches into the branch slab of the
        #      SAME output buffer (aliased); x is not re-read. ----
        br_blk = C // CO4   # channel-block index of the branch slab (= 1)
        out_flat = pl.pallas_call(
            _upsample_kernel,
            out_shape=jax.ShapeDtypeStruct((B, 2 * C, HW), cdt),
            grid_spec=pltpu.PrefetchScalarGridSpec(
                num_scalar_prefetch=0,
                grid=(B, kc),
                in_specs=[
                    pl.BlockSpec(memory_space=pl.ANY),   # aliased partial output
                    pl.BlockSpec((1, CO4, SS_pad), lambda b, k: (b, 0, 0)),
                    pl.BlockSpec((SS_pad, tile_c), lambda b, k: (0, k)),
                ],
                out_specs=pl.BlockSpec((1, CO4, tile_c),
                                       lambda b, k, cb=br_blk: (b, cb, k)),
            ),
            input_output_aliases={0: 0},
            compiler_params=pltpu.CompilerParams(
                dimension_semantics=("parallel", "parallel"),
                vmem_limit_bytes=vmem_limit),
        )(out_part, yT, upT)

        return out_flat.reshape(B, 2 * C, H, W)          # free reshape

    return forward


# ----------------------------------------------------------------------------
# Pure-JAX reference (separable einsums in NCHW, independent code path)
# ----------------------------------------------------------------------------
def _reference(x_nchw, params, pool_sizes):
    B, C, H, W = x_nchw.shape
    outs = [x_nchw]
    for S, (w, bn_scale, bn_shift) in zip(pool_sizes, params):
        ph = jnp.asarray(_adaptive_avg_pool_matrix(H, S))
        pw = jnp.asarray(_adaptive_avg_pool_matrix(W, S))
        uh = jnp.asarray(_bilinear_upsample_matrix(S, H))
        uw = jnp.asarray(_bilinear_upsample_matrix(S, W))
        p = jnp.einsum('sh,tw,bchw->bcst', ph, pw, x_nchw)
        y = jnp.einsum('bcst,co->bost', p, w)
        y = jax.nn.relu(y * bn_scale[None, :, None, None]
                        + bn_shift[None, :, None, None])
        o = jnp.einsum('hi,wj,boij->bohw', uh, uw, y)
        outs.append(o)
    return jnp.concatenate(outs, axis=1)


# ----------------------------------------------------------------------------
# Main
# ----------------------------------------------------------------------------
if __name__ == "__main__":
    pool_sizes = (6, 3, 2, 1)
    B, C, H, W = 2, 16, 16, 16
    Co = C // len(pool_sizes)
    eps = 1e-5  # PyTorch BatchNorm2d default

    key = jax.random.PRNGKey(0)
    key, kx = jax.random.split(key)
    x = jax.random.normal(kx, (B, C, H, W), jnp.float32)

    # deterministic synthetic parameters (1x1 conv weight + eval-mode BN, folded)
    params = []
    for _ in pool_sizes:
        key, k1, k2, k3, k4, k5 = jax.random.split(key, 6)
        conv_w = 0.1 * jax.random.normal(k1, (C, Co), jnp.float32)   # (Cin, Cout)
        gamma = 1.0 + 0.1 * jax.random.normal(k2, (Co,), jnp.float32)
        beta = 0.1 * jax.random.normal(k3, (Co,), jnp.float32)
        run_mean = 0.1 * jax.random.normal(k4, (Co,), jnp.float32)
        run_var = jnp.abs(jax.random.normal(k5, (Co,), jnp.float32)) + 0.5
        bn_scale = gamma / jnp.sqrt(run_var + eps)
        bn_shift = beta - run_mean * bn_scale
        params.append((conv_w, bn_scale, bn_shift))

    ref = jax.block_until_ready(_reference(x, params, pool_sizes))

    # 1) f32, explicit small tile (exercises the HW-tiled pooling accumulation).
    fwd = build_pyramid_pooling(H, W, C, pool_sizes, params, tile_hw=128)
    out = jax.block_until_ready(fwd(x))
    assert out.shape == (B, 2 * C, H, W), out.shape
    np.testing.assert_allclose(np.asarray(out), np.asarray(ref),
                               rtol=2e-3, atol=2e-3)

    # 2) B=1 with the channel-split grid axis (v7x megacore path of kernel A).
    fwd_split = build_pyramid_pooling(H, W, C, pool_sizes, params,
                                      tile_hw=128, c_split=2)
    out1 = jax.block_until_ready(fwd_split(x[:1]))
    np.testing.assert_allclose(np.asarray(out1), np.asarray(ref)[:1],
                               rtol=2e-3, atol=2e-3)

    # 3) bf16 activations / constants (halved HBM traffic), f32 accumulation;
    #    auto tile/vmem selection path. Looser tolerance for bf16 rounding.
    fwd_bf16 = build_pyramid_pooling(H, W, C, pool_sizes, params,
                                     compute_dtype=jnp.bfloat16)
    out_bf = jax.block_until_ready(fwd_bf16(x))
    np.testing.assert_allclose(np.asarray(out_bf.astype(jnp.float32)),
                               np.asarray(ref), rtol=5e-2, atol=5e-2)

    print("KERNEL_OK")
</pallas_src>

<mosaic_0001>
module attributes {stable_mosaic.version = 11 : i64} {
  func.func @_upsample_kernel(%arg0: i32, %arg1: i32, %arg2: memref<2x32x256xf32, #tpu.memory_space<any>>, %arg3: memref<1x16x56xf32, #tpu.memory_space<vmem>>, %arg4: memref<56x128xf32, #tpu.memory_space<vmem>>, %arg5: memref<1x16x128xf32, #tpu.memory_space<vmem>>) attributes {dimension_semantics = [#tpu.dimension_semantics<parallel>, #tpu.dimension_semantics<parallel>], iteration_bounds = array<i64: 2, 2>, scalar_prefetch = 0 : i64, scratch_operands = 0 : i64, tpu.core_type = #tpu.core_type<tc>, window_params = [{}, {transform_indices = @transform_1, window_bounds = array<i64: 1, 16, 56>}, {transform_indices = @transform_2, window_bounds = array<i64: 56, 128>}, {transform_indices = @transform_3, window_bounds = array<i64: 1, 16, 128>}]} {
    %c0 = arith.constant 0 : index
    %c0_0 = arith.constant 0 : index
    %c0_1 = arith.constant 0 : index
    %0 = vector.load %arg3[%c0, %c0_0, %c0_1] : memref<1x16x56xf32, #tpu.memory_space<vmem>>, vector<1x16x56xf32>
    %1 = vector.shape_cast %0 : vector<1x16x56xf32> to vector<16x56xf32>
    %c0_2 = arith.constant 0 : index
    %c0_3 = arith.constant 0 : index
    %2 = vector.load %arg4[%c0_2, %c0_3] : memref<56x128xf32, #tpu.memory_space<vmem>>, vector<56x128xf32>
    %cst = arith.constant dense<0.000000e+00> : vector<16x128xf32>
    %3 = tpu.matmul %1, %2, %cst {dimension_numbers = #tpu.dot_dimension_numbers<[1], [0], [0], [1], [0, 0, 1, 1], [], []>} : vector<16x56xf32>, vector<56x128xf32>, vector<16x128xf32> -> vector<16x128xf32>
    %c0_4 = arith.constant 0 : index
    %c0_5 = arith.constant 0 : index
    %c0_6 = arith.constant 0 : index
    %4 = vector.load %arg5[%c0_4, %c0_5, %c0_6] : memref<1x16x128xf32, #tpu.memory_space<vmem>>, vector<1x16x128xf32>
    %5 = vector.shape_cast %4 : vector<1x16x128xf32> to vector<16x128xf32>
    %6 = vector.shape_cast %3 : vector<16x128xf32> to vector<1x16x128xf32>
    tpu.vector_store %arg5[%c0_4, %c0_5, %c0_6], %6 {strides = array<i32>} : memref<1x16x128xf32, #tpu.memory_space<vmem>>, vector<1x16x128xf32>,
    return
  }
  func.func @transform_1(%arg0: i32, %arg1: i32) -> (i32, i32, i32) {
    %c0_i32 = arith.constant 0 : i32
    %c0_i32_0 = arith.constant 0 : i32
    %c0_i32_1 = arith.constant 0 : i32
    return %arg0, %c0_i32, %c0_i32_0 : i32, i32, i32
  }
  func.func @transform_2(%arg0: i32, %arg1: i32) -> (i32, i32) {
    %c0_i32 = arith.constant 0 : i32
    %c0_i32_0 = arith.constant 0 : i32
    return %c0_i32, %arg1 : i32, i32
  }
  func.func @transform_3(%arg0: i32, %arg1: i32) -> (i32, i32, i32) {
    %c1_i32 = arith.constant 1 : i32
    %c0_i32 = arith.constant 0 : i32
    return %arg0, %c1_i32, %arg1 : i32, i32, i32
  }
}

module attributes {stable_mosaic.version = 11 : i64} {
  func.func @_conv_bn_relu_kernel(%arg0: i32, %arg1: memref<1x16x56xf32, #tpu.memory_space<vmem>>, %arg2: memref<16x16xf32, #tpu.memory_space<vmem>>, %arg3: memref<16x1xf32, #tpu.memory_space<vmem>>, %arg4: memref<16x1xf32, #tpu.memory_space<vmem>>, %arg5: memref<1x16x56xf32, #tpu.memory_space<vmem>>) attributes {dimension_semantics = [#tpu.dimension_semantics<parallel>], iteration_bounds = array<i64: 2>, scalar_prefetch = 0 : i64, scratch_operands = 0 : i64, tpu.core_type = #tpu.core_type<tc>, window_params = [{transform_indices = @transform_0, window_bounds = array<i64: 1, 16, 56>}, {pipeline_mode = #tpu.pipeline_mode<synchronous>, transform_indices = @transform_1, window_bounds = array<i64: 16, 16>}, {pipeline_mode = #tpu.pipeline_mode<synchronous>, transform_indices = @transform_2, window_bounds = array<i64: 16, 1>}, {pipeline_mode = #tpu.pipeline_mode<synchronous>, transform_indices = @transform_3, window_bounds = array<i64: 16, 1>}, {transform_indices = @transform_4, window_bounds = array<i64: 1, 16, 56>}]} {
    %c0 = arith.constant 0 : index
    %c0_0 = arith.constant 0 : index
    %0 = vector.load %arg2[%c0, %c0_0] : memref<16x16xf32, #tpu.memory_space<vmem>>, vector<16x16xf32>
    %c0_1 = arith.constant 0 : index
    %c0_2 = arith.constant 0 : index
    %c0_3 = arith.constant 0 : index
    %1 = vector.load %arg1[%c0_1, %c0_2, %c0_3] : memref<1x16x56xf32, #tpu.memory_space<vmem>>, vector<1x16x56xf32>
    %2 = vector.shape_cast %1 : vector<1x16x56xf32> to vector<16x56xf32>
    %cst = arith.constant dense<0.000000e+00> : vector<16x56xf32>
    %3 = tpu.matmul %0, %2, %cst {dimension_numbers = #tpu.dot_dimension_numbers<[1], [0], [0], [1], [0, 0, 1, 1], [], []>} : vector<16x16xf32>, vector<16x56xf32>, vector<16x56xf32> -> vector<16x56xf32>
    %c0_4 = arith.constant 0 : index
    %c0_5 = arith.constant 0 : index
    %4 = vector.load %arg3[%c0_4, %c0_5] : memref<16x1xf32, #tpu.memory_space<vmem>>, vector<16x1xf32>
    %5 = vector.broadcast %4 : vector<16x1xf32> to vector<16x56xf32>
    %6 = arith.mulf %3, %5 : vector<16x56xf32>
    %c0_6 = arith.constant 0 : index
    %c0_7 = arith.constant 0 : index
    %7 = vector.load %arg4[%c0_6, %c0_7] : memref<16x1xf32, #tpu.memory_space<vmem>>, vector<16x1xf32>
    %8 = vector.broadcast %7 : vector<16x1xf32> to vector<16x56xf32>
    %9 = arith.addf %6, %8 : vector<16x56xf32>
    %cst_8 = arith.constant 0.000000e+00 : f32
    %10 = vector.broadcast %cst_8 : f32 to vector<16x56xf32>
    %11 = arith.maximumf %9, %10 : vector<16x56xf32>
    %12 = tpu.iota {dimensions = array<i32: 0>} : vector<16x56xi32>
    %13 = tpu.iota {dimensions = array<i32: 1>} : vector<16x56xi32>
    %c0_i32 = arith.constant 0 : i32
    %14 = vector.broadcast %c0_i32 : i32 to vector<16x56xi32>
    %c0_i32_9 = arith.constant 0 : i32
    %15 = vector.broadcast %c0_i32_9 : i32 to vector<16x56xi32>
    %c4_i32 = arith.constant 4 : i32
    %16 = vector.broadcast %c4_i32 : i32 to vector<16x56xi32>
    %17 = arith.cmpi sge, %12, %16 : vector<16x56xi32>
    %18 = arith.extui %17 : vector<16x56xi1> to vector<16x56xi32>
    %19 = arith.addi %14, %18 : vector<16x56xi32>
    %c36_i32 = arith.constant 36 : i32
    %20 = vector.broadcast %c36_i32 : i32 to vector<16x56xi32>
    %21 = arith.cmpi sge, %13, %20 : vector<16x56xi32>
    %22 = arith.extui %21 : vector<16x56xi1> to vector<16x56xi32>
    %23 = arith.addi %15, %22 : vector<16x56xi32>
    %c8_i32 = arith.constant 8 : i32
    %24 = vector.broadcast %c8_i32 : i32 to vector<16x56xi32>
    %25 = arith.cmpi sge, %12, %24 : vector<16x56xi32>
    %26 = arith.extui %25 : vector<16x56xi1> to vector<16x56xi32>
    %27 = arith.addi %19, %26 : vector<16x56xi32>
    %c45_i32 = arith.constant 45 : i32
    %28 = vector.broadcast %c45_i32 : i32 to vector<16x56xi32>
    %29 = arith.cmpi sge, %13, %28 : vector<16x56xi32>
    %30 = arith.extui %29 : vector<16x56xi1> to vector<16x56xi32>
    %31 = arith.addi %23, %30 : vector<16x56xi32>
    %c12_i32 = arith.constant 12 : i32
    %32 = vector.broadcast %c12_i32 : i32 to vector<16x56xi32>
    %33 = arith.cmpi sge, %12, %32 : vector<16x56xi32>
    %34 = arith.extui %33 : vector<16x56xi1> to vector<16x56xi32>
    %35 = arith.addi %27, %34 : vector<16x56xi32>
    %c49_i32 = arith.constant 49 : i32
    %36 = vector.broadcast %c49_i32 : i32 to vector<16x56xi32>
    %37 = arith.cmpi sge, %13, %36 : vector<16x56xi32>
    %38 = arith.extui %37 : vector<16x56xi1> to vector<16x56xi32>
    %39 = arith.addi %31, %38 : vector<16x56xi32>
    %40 = arith.cmpi eq, %35, %39 : vector<16x56xi32>
    %c50_i32 = arith.constant 50 : i32
    %41 = vector.broadcast %c50_i32 : i32 to vector<16x56xi32>
    %42 = arith.cmpi slt, %13, %41 : vector<16x56xi32>
    %43 = arith.andi %40, %42 : vector<16x56xi1>
    %cst_10 = arith.constant 0.000000e+00 : f32
    %44 = vector.broadcast %cst_10 : f32 to vector<16x56xf32>
    %45 = arith.select %43, %11, %44 : vector<16x56xi1>, vector<16x56xf32>
    %c0_11 = arith.constant 0 : index
    %c0_12 = arith.constant 0 : index
    %c0_13 = arith.constant 0 : index
    %46 = vector.load %arg5[%c0_11, %c0_12, %c0_13] : memref<1x16x56xf32, #tpu.memory_space<vmem>>, vector<1x16x56xf32>
    %47 = vector.shape_cast %46 : vector<1x16x56xf32> to vector<16x56xf32>
    %48 = vector.shape_cast %45 : vector<16x56xf32> to vector<1x16x56xf32>
    tpu.vector_store %arg5[%c0_11, %c0_12, %c0_13], %48 {strides = array<i32>} : memref<1x16x56xf32, #tpu.memory_space<vmem>>, vector<1x16x56xf32>,
    return
  }
  func.func @transform_0(%arg0: i32) -> (i32, i32, i32) {
    %c0_i32 = arith.constant 0 : i32
    %c0_i32_0 = arith.constant 0 : i32
    %c0_i32_1 = arith.constant 0 : i32
    return %arg0, %c0_i32, %c0_i32_0 : i32, i32, i32
  }
  func.func @transform_1(%arg0: i32) -> (i32, i32) {
    %c0_i32 = arith.constant 0 : i32
    %c0_i32_0 = arith.constant 0 : i32
    %c0_i32_1 = arith.constant 0 : i32
    return %c0_i32, %c0_i32_0 : i32, i32
  }
  func.func @transform_2(%arg0: i32) -> (i32, i32) {
    %c0_i32 = arith.constant 0 : i32
    %c0_i32_0 = arith.constant 0 : i32
    %c0_i32_1 = arith.constant 0 : i32
    return %c0_i32, %c0_i32_0 : i32, i32
  }
  func.func @transform_3(%arg0: i32) -> (i32, i32) {
    %c0_i32 = arith.constant 0 : i32
    %c0_i32_0 = arith.constant 0 : i32
    %c0_i32_1 = arith.constant 0 : i32
    return %c0_i32, %c0_i32_0 : i32, i32
  }
  func.func @transform_4(%arg0: i32) -> (i32, i32, i32) {
    %c0_i32 = arith.constant 0 : i32
    %c0_i32_0 = arith.constant 0 : i32
    %c0_i32_1 = arith.constant 0 : i32
    return %arg0, %c0_i32, %c0_i32_0 : i32, i32, i32
  }
}

module attributes {stable_mosaic.version = 11 : i64} {
  func.func @_pool_identity_kernel(%arg0: i32, %arg1: i32, %arg2: i32, %arg3: memref<1x16x128xf32, #tpu.memory_space<vmem>>, %arg4: memref<128x56xf32, #tpu.memory_space<vmem>>, %arg5: memref<1x16x128xf32, #tpu.memory_space<vmem>>, %arg6: memref<1x16x56xf32, #tpu.memory_space<vmem>>, %arg7: memref<16x56xf32, #tpu.memory_space<vmem>>) attributes {dimension_semantics = [#tpu.dimension_semantics<parallel>, #tpu.dimension_semantics<parallel>, #tpu.dimension_semantics<arbitrary>], iteration_bounds = array<i64: 2, 1, 2>, scalar_prefetch = 0 : i64, scratch_operands = 1 : i64, tpu.core_type = #tpu.core_type<tc>, window_params = [{transform_indices = @transform_0, window_bounds = array<i64: 1, 16, 128>}, {transform_indices = @transform_1, window_bounds = array<i64: 128, 56>}, {transform_indices = @transform_2, window_bounds = array<i64: 1, 16, 128>}, {transform_indices = @transform_3, window_bounds = array<i64: 1, 16, 56>}]} {
    %c0_i32 = arith.constant 0 : i32
    %0 = arith.cmpi eq, %arg2, %c0_i32 : i32
    %1 = arith.extui %0 : i1 to i32
    %c0_i32_0 = arith.constant 0 : i32
    %2 = arith.cmpi ne, %1, %c0_i32_0 : i32
    scf.if %2 {
      %cst_13 = arith.constant 0.000000e+00 : f32
      %16 = vector.broadcast %cst_13 : f32 to vector<16x56xf32>
      %c0_14 = arith.constant 0 : index
      %c0_15 = arith.constant 0 : index
      %17 = vector.load %arg7[%c0_14, %c0_15] : memref<16x56xf32, #tpu.memory_space<vmem>>, vector<16x56xf32>
      tpu.vector_store %arg7[%c0_14, %c0_15], %16 {strides = array<i32>} : memref<16x56xf32, #tpu.memory_space<vmem>>, vector<16x56xf32>,
    } else {
    }
    %c0 = arith.constant 0 : index
    %c0_1 = arith.constant 0 : index
    %c0_2 = arith.constant 0 : index
    %3 = vector.load %arg3[%c0, %c0_1, %c0_2] : memref<1x16x128xf32, #tpu.memory_space<vmem>>, vector<1x16x128xf32>
    %4 = vector.shape_cast %3 : vector<1x16x128xf32> to vector<16x128xf32>
    %c0_3 = arith.constant 0 : index
    %c0_4 = arith.constant 0 : index
    %c0_5 = arith.constant 0 : index
    %5 = vector.load %arg5[%c0_3, %c0_4, %c0_5] : memref<1x16x128xf32, #tpu.memory_space<vmem>>, vector<1x16x128xf32>
    %6 = vector.shape_cast %5 : vector<1x16x128xf32> to vector<16x128xf32>
    %7 = vector.shape_cast %4 : vector<16x128xf32> to vector<1x16x128xf32>
    tpu.vector_store %arg5[%c0_3, %c0_4, %c0_5], %7 {strides = array<i32>} : memref<1x16x128xf32, #tpu.memory_space<vmem>>, vector<1x16x128xf32>,
    %c0_6 = arith.constant 0 : index
    %c0_7 = arith.constant 0 : index
    %8 = vector.load %arg7[%c0_6, %c0_7] : memref<16x56xf32, #tpu.memory_space<vmem>>, vector<16x56xf32>
    %c0_8 = arith.constant 0 : index
    %c0_9 = arith.constant 0 : index
    %9 = vector.load %arg4[%c0_8, %c0_9] : memref<128x56xf32, #tpu.memory_space<vmem>>, vector<128x56xf32>
    %cst = arith.constant dense<0.000000e+00> : vector<16x56xf32>
    %10 = tpu.matmul %4, %9, %cst {dimension_numbers = #tpu.dot_dimension_numbers<[1], [0], [0], [1], [0, 0, 1, 1], [], []>} : vector<16x128xf32>, vector<128x56xf32>, vector<16x56xf32> -> vector<16x56xf32>
    %11 = arith.addf %8, %10 : vector<16x56xf32>
    %c0_10 = arith.constant 0 : index
    %c0_11 = arith.constant 0 : index
    %12 = vector.load %arg7[%c0_10, %c0_11] : memref<16x56xf32, #tpu.memory_space<vmem>>, vector<16x56xf32>
    tpu.vector_store %arg7[%c0_10, %c0_11], %11 {strides = array<i32>} : memref<16x56xf32, #tpu.memory_space<vmem>>, vector<16x56xf32>,
    %c1_i32 = arith.constant 1 : i32
    %13 = arith.cmpi eq, %arg2, %c1_i32 : i32
    %14 = arith.extui %13 : i1 to i32
    %c0_i32_12 = arith.constant 0 : i32
    %15 = arith.cmpi ne, %14, %c0_i32_12 : i32
    scf.if %15 {
      %c0_13 = arith.constant 0 : index
      %c0_14 = arith.constant 0 : index
      %16 = vector.load %arg7[%c0_13, %c0_14] : memref<16x56xf32, #tpu.memory_space<vmem>>, vector<16x56xf32>
      %c0_15 = arith.constant 0 : index
      %c0_16 = arith.constant 0 : index
      %c0_17 = arith.constant 0 : index
      %17 = vector.load %arg6[%c0_15, %c0_16, %c0_17] : memref<1x16x56xf32, #tpu.memory_space<vmem>>, vector<1x16x56xf32>
      %18 = vector.shape_cast %17 : vector<1x16x56xf32> to vector<16x56xf32>
      %19 = vector.shape_cast %16 : vector<16x56xf32> to vector<1x16x56xf32>
      tpu.vector_store %arg6[%c0_15, %c0_16, %c0_17], %19 {strides = array<i32>} : memref<1x16x56xf32, #tpu.memory_space<vmem>>, vector<1x16x56xf32>,
    } else {
    }
    return
  }
  func.func @transform_0(%arg0: i32, %arg1: i32, %arg2: i32) -> (i32, i32, i32) {
    %c0_i32 = arith.constant 0 : i32
    return %arg0, %arg1, %arg2 : i32, i32, i32
  }
  func.func @transform_1(%arg0: i32, %arg1: i32, %arg2: i32) -> (i32, i32) {
    %c0_i32 = arith.constant 0 : i32
    %c0_i32_0 = arith.constant 0 : i32
    return %arg2, %c0_i32 : i32, i32
  }
  func.func @transform_2(%arg0: i32, %arg1: i32, %arg2: i32) -> (i32, i32, i32) {
    %c0_i32 = arith.constant 0 : i32
    return %arg0, %arg1, %arg2 : i32, i32, i32
  }
  func.func @transform_3(%arg0: i32, %arg1: i32, %arg2: i32) -> (i32, i32, i32) {
    %c0_i32 = arith.constant 0 : i32
    %c0_i32_0 = arith.constant 0 : i32
    return %arg0, %arg1, %c0_i32 : i32, i32, i32
  }
}

</mosaic_0001>

<llo_original>
// kernel: forward.5
$region0: #{forward.5}
  #allocation0 [shape = 'u32[]', space=smem, size = 0x4, offset = 0x4, fixed_abs, tag = 'smem constant byte address 0x4 - core index']
  #allocation1 [shape = 'u32[144,128]{1,0:T(1,128)}', space=vmem, size = 0x12000, scoped, tag = 'internal scratch']
  %s0 = inlined_call_operand.vmem [shape: f32[2,32,256], index: 0, kind: input, shape index: {}, may-alias: {0,3}]
  %s1 = inlined_call_operand.vmem [shape: f32[2,16,56], index: 1, kind: input, shape index: {}]
  %s2 = inlined_call_operand.vmem [shape: f32[56,256], index: 2, kind: input, shape index: {}]
  %s3 = inlined_call_operand.vmem [shape: f32[2,32,256], index: 3, kind: output, shape index: {}, may-alias: {0,3}]
  %s4 = sld [smem:[#allocation0]]
  $region113: #{forward.5} parent=0
    _
  %s6 = ssub.s32 1, %s4
  %s7 = scalar_select 0, %s6, %s4
  $region1: #{forward.5} parent=0
    #allocation2 [shape = 'u8[57344]{0}', space=vmem, size = 0xe000, scoped, tag = 'input window, operand 2']
    #allocation3 [shape = 'u8[16384]{0}', space=vmem, size = 0x4000, scoped, tag = 'output window, operand 0']
    loop: start=0, step=1, limit=6
    $region2: #{forward.5} parent=1 // loop_pre_header
      _
    $region3: #{forward.5} parent=1 // loop_header
      %s9 = sphi 0, %s13
      %p10 = scmp.ge.s32.totalorder %s9, 6
      %s16 = sphi 0, %s28
      %s17 = sphi 0, %s24
      %s18 = sphi 0, %s16
      %s19 = sphi 0, %s17
      %s20 = sphi 0, %s18
      %s21 = sphi 0, %s19
      %s31 = sphi 0, %s33
      %s34 = sphi 0, %s31
      %s35 = sphi 0, %s34
      %s51 = sphi 0, %s35
      %s57 = sphi 0, %s59
      %s60 = sphi 0, %s57
      %s61 = sphi 0, %s60
      %s77 = sphi 0, %s61
      %s85 = sphi 0, %s87
      %s88 = sphi 0, %s85
      %s89 = sphi 0, %s88
      %s105 = sphi 0, %s89
    $region4: #{forward.5} parent=1 // loop_header_branch
      %12 = sbr.rel (%p10) target = $region8
    $region5: #{forward.5} parent=1 // loop_body
      %s14 = ssub.s32 %s9, 1
      %s15 = ssub.s32 %s9, 2
      %s22 = sadd.s32 1, %s17
      %p23 = scmp.ge.s32.totalorder %s22, 2
      %s24 = scalar_select %p23, 0, %s22
      %s25 = sadd.s32 1, %s16
      %s26 = scalar_select %p23, %s25, %s16
      %p27 = scmp.ge.s32.totalorder %s26, 2
      %s28 = scalar_select %p27, 0, %s26
      %s29 = ssub.s32 %s16, %s28
      %p30 = scmp.eq.s32.totalorder %s29, 0
      %s32 = sadd.s32 %s31, 1
      %s33 = scalar_select %p30, %s31, %s32
      %p36 = pneg %p30
      %p37 = scmp.eq.s32.totalorder %s9, 3
      %p38 = por %p36, %p37
      %p39 = scmp.ne.s32.totalorder %s31, %s34
      %p40 = scmp.eq.s32.totalorder %s9, 0
      %p41 = por %p39, %p40
      %p42 = scmp.ne.s32.totalorder %s31, %s34
      %p43 = scmp.eq.s32.totalorder %s14, 3
      %p44 = por %p42, %p43
      %p45 = scmp.ne.s32.totalorder %s34, %s35
      %p46 = scmp.eq.s32.totalorder %s14, 0
      %p47 = por %p45, %p46
      %p48 = scmp.ne.s32.totalorder %s34, %s35
      %p49 = scmp.eq.s32.totalorder %s15, 3
      %p50 = por %p48, %p49
      %p52 = scmp.ne.s32.totalorder %s35, %s51
      %p53 = scmp.eq.s32.totalorder %s15, 0
      %p54 = por %p52, %p53
      %s55 = ssub.s32 %s17, %s24
      %p56 = scmp.eq.s32.totalorder %s55, 0
      %s58 = sadd.s32 %s57, 1
      %s59 = scalar_select %p56, %s57, %s58
      %p62 = pneg %p56
      %p63 = scmp.eq.s32.totalorder %s9, 3
      %p64 = por %p62, %p63
      %p65 = scmp.ne.s32.totalorder %s57, %s60
      %p66 = scmp.eq.s32.totalorder %s9, 0
      %p67 = por %p65, %p66
      %p68 = scmp.ne.s32.totalorder %s57, %s60
      %p69 = scmp.eq.s32.totalorder %s14, 3
      %p70 = por %p68, %p69
      %p71 = scmp.ne.s32.totalorder %s60, %s61
      %p72 = scmp.eq.s32.totalorder %s14, 0
      %p73 = por %p71, %p72
      %p74 = scmp.ne.s32.totalorder %s60, %s61
      %p75 = scmp.eq.s32.totalorder %s15, 3
      %p76 = por %p74, %p75
      %p78 = scmp.ne.s32.totalorder %s61, %s77
      %p79 = scmp.eq.s32.totalorder %s15, 0
      %p80 = por %p78, %p79
      %s81 = ssub.s32 %s16, %s28
      %s82 = ssub.s32 %s17, %s24
      %s83 = sor.u32 %s81, %s82
      %p84 = scmp.eq.s32.totalorder %s83, 0
      %s86 = sadd.s32 %s85, 1
      %s87 = scalar_select %p84, %s85, %s86
      %p90 = pneg %p84
      %p91 = scmp.eq.s32.totalorder %s9, 3
      %p92 = por %p90, %p91
      %p93 = scmp.ne.s32.totalorder %s85, %s88
      %p94 = scmp.eq.s32.totalorder %s9, 0
      %p95 = por %p93, %p94
      %p96 = scmp.ne.s32.totalorder %s85, %s88
      %p97 = scmp.eq.s32.totalorder %s14, 3
      %p98 = por %p96, %p97
      %p99 = scmp.ne.s32.totalorder %s88, %s89
      %p100 = scmp.eq.s32.totalorder %s14, 0
      %p101 = por %p99, %p100
      %p102 = scmp.ne.s32.totalorder %s88, %s89
      %p103 = scmp.eq.s32.totalorder %s15, 3
      %p104 = por %p102, %p103
      %p106 = scmp.ne.s32.totalorder %s89, %s105
      %p107 = scmp.eq.s32.totalorder %s15, 0
      %p108 = por %p106, %p107
      %p109 = scmp.le.s32.totalorder 1, %s9
      %p110 = scmp.lt.s32.totalorder %s9, 5
      %p111 = pnand %p109, %p110
      %p112 = pneg %p111
      // Predicated region
      $region9: #{forward.5} parent=5 // pred_check
        _
      $region10: #{forward.5} parent=5 // pred_check_branch
        %114 = sbr.rel (%p111) target = $region12
      $region11: #{forward.5} parent=5 // pred_region
        %s115 = ssub.s32 %s9, 1
      $region12: #{forward.5} parent=5 // pred_fallthru
        _
      %p116 = scmp.lt.s32.totalorder %s9, 4
      // Predicated region
      $region13: #{forward.5} parent=5 // pred_check
        %p117 = pneg %p116
      $region14: #{forward.5} parent=5 // pred_check_branch
        %119 = sbr.rel (%p117) target = $region16
      $region15: #{forward.5} parent=5 // pred_region
        // Predicated region
        $region17: #{forward.5} parent=15 // pred_check
          %p120 = pneg %p41
        $region18: #{forward.5} parent=15 // pred_check_branch
          %122 = sbr.rel (%p120) target = $region20
        $region19: #{forward.5} parent=15 // pred_region
          %p123 = scmp.lt.s32.totalorder %s16, 1
          %s124 = scalar_select %p123, %s16, 1
          %s125 = smul.addr %s124, 2
          %s126 = smul.addr %s125, 8
          %s127 = scalar_lea.vmem %s1, %s126
        $region20: #{forward.5} parent=15 // pred_fallthru
          _
        // Predicated region
        $region21: #{forward.5} parent=15 // pred_check
          %p128 = pneg %p67
        $region22: #{forward.5} parent=15 // pred_check_branch
          %130 = sbr.rel (%p128) target = $region24
        $region23: #{forward.5} parent=15 // pred_region
          %s131 = sand.u32 %s57, 1
          %s132 = sand.u32 %s57, 1
          %s133 = smul.addr %s132, 56
          %s134 = scalar_lea.vmem [#allocation2], %s133
          %s135 = smul.addr %s17, 8
          %s136 = scalar_lea.vmem %s2, %s135
          // Predicated region
          $region25: #{forward.5} parent=23 // pred_check
            _
          $region26: #{forward.5} parent=23 // pred_check_branch
            %138 = sbr.rel (0) target = $region28
          $region27: #{forward.5} parent=23 // pred_region
            // Predicated region
            $region29: #{forward.5} parent=27 // pred_check
              _
            $region30: #{forward.5} parent=27 // pred_check_branch
              %140 = sbr.rel (0) target = $region32
            $region31: #{forward.5} parent=27 // pred_region
              // Predicated region
              $region44: #{forward.5} parent=31 // pred_check
                _
              $region45: #{forward.5} parent=31 // pred_check_branch
                %167 = sbr.rel (0) target = $region47
              $region46: #{forward.5} parent=31 // pred_region
                loop: start=0, step=1, limit=1
                $region48: #{forward.5} parent=46 // loop_pre_header
                  _
                $region49: #{forward.5} parent=46 // loop_header
                  %s169 = sphi 0, %s173
                  %p170 = scmp.ge.s32.totalorder %s169, 1
                  %s174 = sphi %s136, %s136
                  %s175 = sphi %s134, %s134
                $region50: #{forward.5} parent=46 // loop_header_branch
                  %172 = sbr.rel (%p170) target = $region54
                $region51: #{forward.5} parent=46 // loop_body
                  %v176 = vld [vmem:[%s174] sm:$0xff]
                  %177 = vst [vmem:[%s175] sm:$0xff] %v176
                  %v178 = vld [vmem:[%s174 + $0x10] sm:$0xff]
                  %179 = vst [vmem:[%s175 + $0x8] sm:$0xff] %v178
                  %v180 = vld [vmem:[%s174 + $0x20] sm:$0xff]
                  %181 = vst [vmem:[%s175 + $0x10] sm:$0xff] %v180
                  %v182 = vld [vmem:[%s174 + $0x30] sm:$0xff]
                  %183 = vst [vmem:[%s175 + $0x18] sm:$0xff] %v182
                  %v184 = vld [vmem:[%s174 + $0x40] sm:$0xff]
                  %185 = vst [vmem:[%s175 + $0x20] sm:$0xff] %v184
                  %v186 = vld [vmem:[%s174 + $0x50] sm:$0xff]
                  %187 = vst [vmem:[%s175 + $0x28] sm:$0xff] %v186
                  %v188 = vld [vmem:[%s174 + $0x60] sm:$0xff]
                  %189 = vst [vmem:[%s175 + $0x30] sm:$0xff] %v188
                $region52: #{forward.5} parent=46 // loop_footer
                  %s173 = sadd.s32 1, %s169
                $region53: #{forward.5} parent=46 // loop_footer_branch
                  %168 = sbr.rel target = $region49
                $region54: #{forward.5} parent=46 // loop_exit
                  _
              $region47: #{forward.5} parent=31 // pred_fallthru
                _
              // Predicated region
              $region55: #{forward.5} parent=31 // pred_check
                _
              $region56: #{forward.5} parent=31 // pred_check_branch
                %191 = sbr.rel target = $region58
              $region57: #{forward.5} parent=31 // pred_region
                _
              $region58: #{forward.5} parent=31 // pred_fallthru
                _
            $region32: #{forward.5} parent=27 // pred_fallthru
              _
            // Predicated region
            $region33: #{forward.5} parent=27 // pred_check
              _
            $region34: #{forward.5} parent=27 // pred_check_branch
              %142 = sbr.rel target = $region36
            $region35: #{forward.5} parent=27 // pred_region
              loop: start=0, step=1, limit=1
              $region37: #{forward.5} parent=35 // loop_pre_header
                _
              $region38: #{forward.5} parent=35 // loop_header
                %s145 = sphi 0, %s149
                %p146 = scmp.ge.s32.totalorder %s145, 1
                %s150 = sphi %s136, %s136
                %s151 = sphi %s134, %s134
              $region39: #{forward.5} parent=35 // loop_header_branch
                %148 = sbr.rel (%p146) target = $region43
              $region40: #{forward.5} parent=35 // loop_body
                %v152 = vld [vmem:[%s150] sm:$0xff]
                %153 = vst [vmem:[%s151] sm:$0xff] %v152
                %v154 = vld [vmem:[%s150 + $0x10] sm:$0xff]
                %155 = vst [vmem:[%s151 + $0x8] sm:$0xff] %v154
                %v156 = vld [vmem:[%s150 + $0x20] sm:$0xff]
                %157 = vst [vmem:[%s151 + $0x10] sm:$0xff] %v156
                %v158 = vld [vmem:[%s150 + $0x30] sm:$0xff]
                %159 = vst [vmem:[%s151 + $0x18] sm:$0xff] %v158
                %v160 = vld [vmem:[%s150 + $0x40] sm:$0xff]
                %161 = vst [vmem:[%s151 + $0x20] sm:$0xff] %v160
                %v162 = vld [vmem:[%s150 + $0x50] sm:$0xff]
                %163 = vst [vmem:[%s151 + $0x28] sm:$0xff] %v162
                %v164 = vld [vmem:[%s150 + $0x60] sm:$0xff]
                %165 = vst [vmem:[%s151 + $0x30] sm:$0xff] %v164
              $region41: #{forward.5} parent=35 // loop_footer
                %s149 = sadd.s32 1, %s145
              $region42: #{forward.5} parent=35 // loop_footer_branch
                %144 = sbr.rel target = $region38
              $region43: #{forward.5} parent=35 // loop_exit
                _
            $region36: #{forward.5} parent=27 // pred_fallthru
              _
          $region28: #{forward.5} parent=23 // pred_fallthru
            _
          %192 = vnop
        $region24: #{forward.5} parent=15 // pred_fallthru
          _
      $region16: #{forward.5} parent=5 // pred_fallthru
        _
      %p193 = scmp.le.s32.totalorder 1, %s9
      %p194 = scmp.lt.s32.totalorder %s9, 5
      %p195 = pnand %p193, %p194
      %p196 = pneg %p195
      // Predicated region
      $region59: #{forward.5} parent=5 // pred_check
        _
      $region60: #{forward.5} parent=5 // pred_check_branch
        %198 = sbr.rel (%p195) target = $region62
      $region61: #{forward.5} parent=5 // pred_region
        %s199 = ssub.s32 %s9, 1
        %s200 = sand.u32 %s60, 1
        %s201 = sand.u32 %s60, 1
        %s202 = smul.addr %s201, 56
        %s203 = scalar_lea.vmem [#allocation2], %s202
        // Predicated region
        $region63: #{forward.5} parent=61 // pred_check
          %p204 = pneg %p73
        $region64: #{forward.5} parent=61 // pred_check_branch
          %206 = sbr.rel (%p204) target = $region66
        $region65: #{forward.5} parent=61 // pred_region
          _
        $region66: #{forward.5} parent=61 // pred_fallthru
          _
        %p207 = scmp.lt.s32.totalorder %s18, 1
        %s208 = scalar_select %p207, %s18, 1
        %s209 = smul.addr %s208, 2
        %s210 = smul.addr %s209, 8
        %s211 = scalar_lea.vmem %s1, %s210
        %p212 = pneg %p47
        %p213 = pneg %p44
        %s214 = sand.u32 %s60, 1
        %s215 = sand.u32 %s60, 1
        %s216 = smul.addr %s215, 56
        %s217 = scalar_lea.vmem [#allocation2], %s216
        %p218 = pneg %p73
        %p219 = pneg %p70
        %p220 = pneg %p101
        %p221 = pneg %p98
        %s222 = sand.u32 %s88, 1
        %s223 = sand.u32 %s88, 1
        %s224 = smul.addr %s223, 16
        %s225 = scalar_lea.vmem [#allocation3], %s224
        %p226 = scmp.lt.s32.totalorder %s18, 1
        %s227 = scalar_select %p226, %s18, 1
        %s228 = smul.addr %s227, 2
        %s229 = smul.addr %s228, 8
        %s230 = scalar_lea.vmem %s1, %s229
        %v231 = vld [vmem:[%s230] sm:$0xff]
        %v232 = vld [vmem:[%s230 + $0x8] sm:$0xff]
        %v233 = vld [vmem:[%s203] sm:$0xff]
        %v234 = vld [vmem:[%s203 + $0x8] sm:$0xff]
        %v235 = vld [vmem:[%s203 + $0x10] sm:$0xff]
        %v236 = vld [vmem:[%s203 + $0x18] sm:$0xff]
        %v237 = vld [vmem:[%s203 + $0x20] sm:$0xff]
        %v238 = vld [vmem:[%s203 + $0x28] sm:$0xff]
        %v239 = vld [vmem:[%s203 + $0x30] sm:$0xff]
        %vm240 = vcmask 457728
        %v242 = vsel %vm240, %v231, 0
        %v245 = vsel %vm240, %v232, 0
        %247 = vmatprep.subr.mxu0 0.0
        %248 = vmatpush1.msra.mxu0 %v233
        %249 = vmatprep.subr.mxu0 0.0
        %250 = vmatpush1.msra.mxu0 %v234
        %251 = vmatprep.subr.mxu0 0.0
        %252 = vmatpush1.msra.mxu0 %v235
        %253 = vmatprep.subr.mxu0 0.0
        %254 = vmatpush1.msra.mxu0 %v236
        %255 = vmatprep.subr.mxu0 0.0
        %256 = vmatpush1.msra.mxu0 %v237
        %257 = vmatprep.subr.mxu0 0.0
        %258 = vmatpush1.msra.mxu0 %v238
        %259 = vmatprep.subr.mxu0 0.0
        %260 = vmatpush1.msra.mxu0 %v239
        %261 = vmatprep.subr.mxu0 0.0
        %262 = vmatpush1.msra.mxu0 0.0
        %263 = vmatprep.subr.mxu0 0.0
        %264 = vmatpush1.msra.mxu0 0.0
        %265 = vmatprep.subr.mxu0 0.0
        %266 = vmatpush1.msra.mxu0 0.0
        %267 = vmatprep.subr.mxu0 0.0
        %268 = vmatpush1.msra.mxu0 0.0
        %269 = vmatprep.subr.mxu0 0.0
        %270 = vmatpush1.msra.mxu0 0.0
        %271 = vmatprep.subr.mxu0 0.0
        %272 = vmatpush1.msra.mxu0 0.0
        %273 = vmatprep.subr.mxu0 0.0
        %274 = vmatpush1.msra.mxu0 0.0
        %275 = vmatprep.subr.mxu0 0.0
        %276 = vmatpush1.msra.mxu0 0.0
        %277 = vmatprep.subr.mxu0 0.0
        %278 = vmatpush1.msra.mxu0 0.0
        %279 = vmatprep.subr.mxu0 0.0
        %280 = vmatpush1.msra.mxu0 0.0
        %281 = vmatprep.subr.mxu0 0.0
        %282 = vmatpush1.msra.mxu0 0.0
        %283 = vmatprep.subr.mxu0 0.0
        %284 = vmatpush1.msra.mxu0 0.0
        %285 = vmatprep.subr.mxu0 0.0
        %286 = vmatpush1.msra.mxu0 0.0
        %287 = vmatprep.subr.mxu0 0.0
        %288 = vmatpush1.msra.mxu0 0.0
        %289 = vmatprep.subr.mxu0 0.0
        %290 = vmatpush1.msra.mxu0 0.0
        %291 = vmatprep.subr.mxu0 0.0
        %292 = vmatpush1.msra.mxu0 0.0
        %293 = vmatprep.subr.mxu0 0.0
        %294 = vmatpush1.msra.mxu0 0.0
        %295 = vmatprep.subr.mxu0 0.0
        %296 = vmatpush1.msra.mxu0 0.0
        %297 = vmatprep.subr.mxu0 0.0
        %298 = vmatpush1.msra.mxu0 0.0
        %299 = vmatprep.subr.mxu0 0.0
        %300 = vmatpush1.msra.mxu0 0.0
        %301 = vmatprep.subr.mxu0 0.0
        %302 = vmatpush1.msra.mxu0 0.0
        %303 = vmatprep.subr.mxu0 0.0
        %304 = vmatpush1.msra.mxu0 0.0
        %305 = vmatprep.subr.mxu0 0.0
        %306 = vmatpush1.msra.mxu0 0.0
        %307 = vmatprep.subr.mxu0 0.0
        %308 = vmatpush1.msra.mxu0 0.0
        %309 = vmatprep.subr.mxu0 0.0
        %310 = vmatpush1.msra.mxu0 0.0
        %311 = vmatprep.mubr.f32.mxu0 0.0
        %312 = vmatmul.mubr.f32.gmra.mrb[0].mxu0 %v242
        %v313 = vpop.f32.mrb[0].mxu0
        %v314 = vadd.f32 0.0, %v313
        %v315 = vpop.f32.mrb[0].mxu0
        %316 = vmatprep.mubr.f32.mxu0 0.0
        %317 = vmatmul.mubr.f32.gmra.mrb[0].mxu0 %v245
        %v318 = vpop.f32.mrb[0].mxu0
        %v319 = vadd.f32 0.0, %v318
        %v320 = vpop.f32.mrb[0].mxu0
        %321 = vdwg.mxu0
        %322 = vst [vmem:[%s225] sm:$0xff] %v314
        %323 = vst [vmem:[%s225 + $0x8] sm:$0xff] %v319
        %s324 = sand.u32 %s88, 1
        %s325 = sand.u32 %s88, 1
        %s326 = smul.addr %s325, 16
        %s327 = scalar_lea.vmem [#allocation3], %s326
        // Predicated region
        $region67: #{forward.5} parent=61 // pred_check
          %p328 = pneg %p98
        $region68: #{forward.5} parent=61 // pred_check_branch
          %330 = sbr.rel (%p328) target = $region70
        $region69: #{forward.5} parent=61 // pred_region
          %s331 = sadd.s32 %s19, 4
          %s332 = smul.addr %s18, 8
          %s333 = sadd.s32 %s331, %s332
          %s334 = smul.addr %s333, 8
          %s335 = scalar_lea.vmem %s3, %s334
          // Predicated region
          $region71: #{forward.5} parent=69 // pred_check
            _
          $region72: #{forward.5} parent=69 // pred_check_branch
            %337 = sbr.rel (0) target = $region74
          $region73: #{forward.5} parent=69 // pred_region
            // Predicated region
            $region75: #{forward.5} parent=73 // pred_check
              _
            $region76: #{forward.5} parent=73 // pred_check_branch
              %339 = sbr.rel (0) target = $region78
            $region77: #{forward.5} parent=73 // pred_region
              // Predicated region
              $region90: #{forward.5} parent=77 // pred_check
                _
              $region91: #{forward.5} parent=77 // pred_check_branch
                %356 = sbr.rel (0) target = $region93
              $region92: #{forward.5} parent=77 // pred_region
                loop: start=0, step=1, limit=1
                $region94: #{forward.5} parent=92 // loop_pre_header
                  _
                $region95: #{forward.5} parent=92 // loop_header
                  %s358 = sphi 0, %s362
                  %p359 = scmp.ge.s32.totalorder %s358, 1
                  %s363 = sphi %s327, %s327
                  %s364 = sphi %s335, %s335
                $region96: #{forward.5} parent=92 // loop_header_branch
                  %361 = sbr.rel (%p359) target = $region100
                $region97: #{forward.5} parent=92 // loop_body
                  %v365 = vld [vmem:[%s363] sm:$0xff]
                  %366 = vst [vmem:[%s364] sm:$0xff] %v365
                  %v367 = vld [vmem:[%s363 + $0x8] sm:$0xff]
                  %368 = vst [vmem:[%s364 + $0x10] sm:$0xff] %v367
                $region98: #{forward.5} parent=92 // loop_footer
                  %s362 = sadd.s32 1, %s358
                $region99: #{forward.5} parent=92 // loop_footer_branch
                  %357 = sbr.rel target = $region95
                $region100: #{forward.5} parent=92 // loop_exit
                  _
              $region93: #{forward.5} parent=77 // pred_fallthru
                _
              // Predicated region
              $region101: #{forward.5} parent=77 // pred_check
                _
              $region102: #{forward.5} parent=77 // pred_check_branch
                %370 = sbr.rel target = $region104
              $region103: #{forward.5} parent=77 // pred_region
                _
              $region104: #{forward.5} parent=77 // pred_fallthru
                _
            $region78: #{forward.5} parent=73 // pred_fallthru
              _
            // Predicated region
            $region79: #{forward.5} parent=73 // pred_check
              _
            $region80: #{forward.5} parent=73 // pred_check_branch
              %341 = sbr.rel target = $region82
            $region81: #{forward.5} parent=73 // pred_region
              loop: start=0, step=1, limit=1
              $region83: #{forward.5} parent=81 // loop_pre_header
                _
              $region84: #{forward.5} parent=81 // loop_header
                %s344 = sphi 0, %s348
                %p345 = scmp.ge.s32.totalorder %s344, 1
                %s349 = sphi %s327, %s327
                %s350 = sphi %s335, %s335
              $region85: #{forward.5} parent=81 // loop_header_branch
                %347 = sbr.rel (%p345) target = $region89
              $region86: #{forward.5} parent=81 // loop_body
                %v351 = vld [vmem:[%s349] sm:$0xff]
                %352 = vst [vmem:[%s350] sm:$0xff] %v351
                %v353 = vld [vmem:[%s349 + $0x8] sm:$0xff]
                %354 = vst [vmem:[%s350 + $0x10] sm:$0xff] %v353
              $region87: #{forward.5} parent=81 // loop_footer
                %s348 = sadd.s32 1, %s344
              $region88: #{forward.5} parent=81 // loop_footer_branch
                %343 = sbr.rel target = $region84
              $region89: #{forward.5} parent=81 // loop_exit
                _
            $region82: #{forward.5} parent=73 // pred_fallthru
              _
          $region74: #{forward.5} parent=69 // pred_fallthru
            _
          %371 = vnop
        $region70: #{forward.5} parent=61 // pred_fallthru
          _
      $region62: #{forward.5} parent=5 // pred_fallthru
        _
      %p372 = scmp.le.s32.totalorder 2, %s9
      // Predicated region
      $region105: #{forward.5} parent=5 // pred_check
        %p373 = pneg %p372
      $region106: #{forward.5} parent=5 // pred_check_branch
        %375 = sbr.rel (%p373) target = $region108
      $region107: #{forward.5} parent=5 // pred_region
        %s376 = ssub.s32 %s9, 2
        // Predicated region
        $region109: #{forward.5} parent=107 // pred_check
          %p377 = pneg %p104
        $region110: #{forward.5} parent=107 // pred_check_branch
          %379 = sbr.rel (%p377) target = $region112
        $region111: #{forward.5} parent=107 // pred_region
          %s380 = sand.u32 %s89, 1
          %s381 = sand.u32 %s89, 1
          %s382 = smul.addr %s381, 16
          %s383 = scalar_lea.vmem [#allocation3], %s382
        $region112: #{forward.5} parent=107 // pred_fallthru
          _
      $region108: #{forward.5} parent=5 // pred_fallthru
        _
    $region6: #{forward.5} parent=1 // loop_footer
      %s13 = sadd.s32 1, %s9
    $region7: #{forward.5} parent=1 // loop_footer_branch
      %8 = sbr.rel target = $region3
    $region8: #{forward.5} parent=1 // loop_exit
      _

// kernel: forward.4
$region0: #{forward.4}
  #allocation0 [shape = 'u32[]', space=smem, size = 0x4, offset = 0x4, fixed_abs, tag = 'smem constant byte address 0x4 - core index']
  #allocation1 [shape = 'u32[144,128]{1,0:T(1,128)}', space=vmem, size = 0x12000, scoped, tag = 'internal scratch']
  %s0 = inlined_call_operand.vmem [shape: f32[2,16,56], index: 0, kind: input, shape index: {}]
  %s1 = inlined_call_operand.vmem [shape: f32[16,16], index: 1, kind: input, shape index: {}]
  %s2 = inlined_call_operand.vmem [shape: f32[16,1], index: 2, kind: input, shape index: {}]
  %s3 = inlined_call_operand.vmem [shape: f32[16,1], index: 3, kind: input, shape index: {}]
  %s4 = inlined_call_operand.vmem [shape: f32[2,16,56], index: 4, kind: output, shape index: {}]
  %s5 = sld [smem:[#allocation0]]
  $region49: #{forward.4} parent=0
    _
  %s7 = ssub.s32 1, %s5
  %s8 = scalar_select 0, %s7, %s5
  loop: start=0, step=1, limit=4
  $region2: #{forward.4} parent=0 // loop_pre_header
    _
  $region3: #{forward.4} parent=0 // loop_header
    %s10 = sphi 0, %s14
    %p11 = scmp.ge.s32.totalorder %s10, 4
    %s20 = sphi 0, %s22
    %s23 = sphi 0, %s20
    %s24 = sphi 0, %s23
    %s40 = sphi 0, %s24
    %s44 = sphi 0, %s44
    %s46 = sphi 0, %s44
    %s47 = sphi 0, %s46
    %s61 = sphi 0, %s47
    %s65 = sphi 0, %s65
    %s67 = sphi 0, %s65
    %s68 = sphi 0, %s67
    %s82 = sphi 0, %s68
    %s86 = sphi 0, %s86
    %s88 = sphi 0, %s86
    %s89 = sphi 0, %s88
    %s103 = sphi 0, %s89
    %s109 = sphi 0, %s111
    %s112 = sphi 0, %s109
    %s113 = sphi 0, %s112
    %s129 = sphi 0, %s113
  $region4: #{forward.4} parent=0 // loop_header_branch
    %13 = sbr.rel (%p11) target = $region8
  $region5: #{forward.4} parent=0 // loop_body
    %s15 = ssub.s32 %s10, 1
    %s16 = ssub.s32 %s10, 2
    %s17 = sadd.s32 %s10, 1
    %s18 = ssub.s32 %s10, %s17
    %p19 = scmp.eq.s32.totalorder %s18, 0
    %s21 = sadd.s32 %s20, 1
    %s22 = scalar_select %p19, %s20, %s21
    %p25 = pneg %p19
    %p26 = scmp.eq.s32.totalorder %s10, 1
    %p27 = por %p25, %p26
    %p28 = scmp.ne.s32.totalorder %s20, %s23
    %p29 = scmp.eq.s32.totalorder %s10, 0
    %p30 = por %p28, %p29
    %p31 = scmp.ne.s32.totalorder %s20, %s23
    %p32 = scmp.eq.s32.totalorder %s15, 1
    %p33 = por %p31, %p32
    %p34 = scmp.ne.s32.totalorder %s23, %s24
    %p35 = scmp.eq.s32.totalorder %s15, 0
    %p36 = por %p34, %p35
    %p37 = scmp.ne.s32.totalorder %s23, %s24
    %p38 = scmp.eq.s32.totalorder %s16, 1
    %p39 = por %p37, %p38
    %p41 = scmp.ne.s32.totalorder %s24, %s40
    %p42 = scmp.eq.s32.totalorder %s16, 0
    %p43 = por %p41, %p42
    %s45 = sadd.s32 %s44, 1
    %p48 = scmp.eq.s32.totalorder %s10, 1
    %p49 = scmp.ne.s32.totalorder %s44, %s46
    %p50 = scmp.eq.s32.totalorder %s10, 0
    %p51 = por %p49, %p50
    %p52 = scmp.ne.s32.totalorder %s44, %s46
    %p53 = scmp.eq.s32.totalorder %s15, 1
    %p54 = por %p52, %p53
    %p55 = scmp.ne.s32.totalorder %s46, %s47
    %p56 = scmp.eq.s32.totalorder %s15, 0
    %p57 = por %p55, %p56
    %p58 = scmp.ne.s32.totalorder %s46, %s47
    %p59 = scmp.eq.s32.totalorder %s16, 1
    %p60 = por %p58, %p59
    %p62 = scmp.ne.s32.totalorder %s47, %s61
    %p63 = scmp.eq.s32.totalorder %s16, 0
    %p64 = por %p62, %p63
    %s66 = sadd.s32 %s65, 1
    %p69 = scmp.eq.s32.totalorder %s10, 1
    %p70 = scmp.ne.s32.totalorder %s65, %s67
    %p71 = scmp.eq.s32.totalorder %s10, 0
    %p72 = por %p70, %p71
    %p73 = scmp.ne.s32.totalorder %s65, %s67
    %p74 = scmp.eq.s32.totalorder %s15, 1
    %p75 = por %p73, %p74
    %p76 = scmp.ne.s32.totalorder %s67, %s68
    %p77 = scmp.eq.s32.totalorder %s15, 0
    %p78 = por %p76, %p77
    %p79 = scmp.ne.s32.totalorder %s67, %s68
    %p80 = scmp.eq.s32.totalorder %s16, 1
    %p81 = por %p79, %p80
    %p83 = scmp.ne.s32.totalorder %s68, %s82
    %p84 = scmp.eq.s32.totalorder %s16, 0
    %p85 = por %p83, %p84
    %s87 = sadd.s32 %s86, 1
    %p90 = scmp.eq.s32.totalorder %s10, 1
    %p91 = scmp.ne.s32.totalorder %s86, %s88
    %p92 = scmp.eq.s32.totalorder %s10, 0
    %p93 = por %p91, %p92
    %p94 = scmp.ne.s32.totalorder %s86, %s88
    %p95 = scmp.eq.s32.totalorder %s15, 1
    %p96 = por %p94, %p95
    %p97 = scmp.ne.s32.totalorder %s88, %s89
    %p98 = scmp.eq.s32.totalorder %s15, 0
    %p99 = por %p97, %p98
    %p100 = scmp.ne.s32.totalorder %s88, %s89
    %p101 = scmp.eq.s32.totalorder %s16, 1
    %p102 = por %p100, %p101
    %p104 = scmp.ne.s32.totalorder %s89, %s103
    %p105 = scmp.eq.s32.totalorder %s16, 0
    %p106 = por %p104, %p105
    %s107 = ssub.s32 %s10, %s17
    %p108 = scmp.eq.s32.totalorder %s107, 0
    %s110 = sadd.s32 %s109, 1
    %s111 = scalar_select %p108, %s109, %s110
    %p114 = pneg %p108
    %p115 = scmp.eq.s32.totalorder %s10, 1
    %p116 = por %p114, %p115
    %p117 = scmp.ne.s32.totalorder %s109, %s112
    %p118 = scmp.eq.s32.totalorder %s10, 0
    %p119 = por %p117, %p118
    %p120 = scmp.ne.s32.totalorder %s109, %s112
    %p121 = scmp.eq.s32.totalorder %s15, 1
    %p122 = por %p120, %p121
    %p123 = scmp.ne.s32.totalorder %s112, %s113
    %p124 = scmp.eq.s32.totalorder %s15, 0
    %p125 = por %p123, %p124
    %p126 = scmp.ne.s32.totalorder %s112, %s113
    %p127 = scmp.eq.s32.totalorder %s16, 1
    %p128 = por %p126, %p127
    %p130 = scmp.ne.s32.totalorder %s113, %s129
    %p131 = scmp.eq.s32.totalorder %s16, 0
    %p132 = por %p130, %p131
    %p133 = scmp.le.s32.totalorder 1, %s10
    %p134 = scmp.lt.s32.totalorder %s10, 3
    %p135 = pnand %p133, %p134
    %p136 = pneg %p135
    // Predicated region
    $region9: #{forward.4} parent=5 // pred_check
      _
    $region10: #{forward.4} parent=5 // pred_check_branch
      %138 = sbr.rel (%p135) target = $region12
    $region11: #{forward.4} parent=5 // pred_region
      %s139 = ssub.s32 %s10, 1
      // Predicated region
      $region13: #{forward.4} parent=11 // pred_check
        %p140 = pneg %p57
      $region14: #{forward.4} parent=11 // pred_check_branch
        %142 = sbr.rel (%p140) target = $region16
      $region15: #{forward.4} parent=11 // pred_region
        _
      $region16: #{forward.4} parent=11 // pred_fallthru
        _
      // Predicated region
      $region17: #{forward.4} parent=11 // pred_check
        %p143 = pneg %p78
      $region18: #{forward.4} parent=11 // pred_check_branch
        %145 = sbr.rel (%p143) target = $region20
      $region19: #{forward.4} parent=11 // pred_region
        _
      $region20: #{forward.4} parent=11 // pred_fallthru
        _
      // Predicated region
      $region21: #{forward.4} parent=11 // pred_check
        %p146 = pneg %p99
      $region22: #{forward.4} parent=11 // pred_check_branch
        %148 = sbr.rel (%p146) target = $region24
      $region23: #{forward.4} parent=11 // pred_region
        _
      $region24: #{forward.4} parent=11 // pred_fallthru
        _
    $region12: #{forward.4} parent=5 // pred_fallthru
      _
    %p149 = scmp.lt.s32.totalorder %s10, 2
    // Predicated region
    $region25: #{forward.4} parent=5 // pred_check
      %p150 = pneg %p149
    $region26: #{forward.4} parent=5 // pred_check_branch
      %152 = sbr.rel (%p150) target = $region28
    $region27: #{forward.4} parent=5 // pred_region
      // Predicated region
      $region29: #{forward.4} parent=27 // pred_check
        %p153 = pneg %p30
      $region30: #{forward.4} parent=27 // pred_check_branch
        %155 = sbr.rel (%p153) target = $region32
      $region31: #{forward.4} parent=27 // pred_region
        %p156 = scmp.lt.s32.totalorder %s10, 1
        %s157 = scalar_select %p156, %s10, 1
        %s158 = smul.addr %s157, 2
        %s159 = smul.addr %s158, 8
        %s160 = scalar_lea.vmem %s0, %s159
      $region32: #{forward.4} parent=27 // pred_fallthru
        _
    $region28: #{forward.4} parent=5 // pred_fallthru
      _
    %p161 = scmp.le.s32.totalorder 1, %s10
    %p162 = scmp.lt.s32.totalorder %s10, 3
    %p163 = pnand %p161, %p162
    %p164 = pneg %p163
    // Predicated region
    $region33: #{forward.4} parent=5 // pred_check
      _
    $region34: #{forward.4} parent=5 // pred_check_branch
      %166 = sbr.rel (%p163) target = $region36
    $region35: #{forward.4} parent=5 // pred_region
      %s167 = ssub.s32 %s10, 1
      %p168 = scmp.lt.s32.totalorder %s15, 1
      %s169 = scalar_select %p168, %s15, 1
      %s170 = smul.addr %s169, 2
      %s171 = smul.addr %s170, 8
      %s172 = scalar_lea.vmem %s0, %s171
      %p173 = pneg %p36
      %p174 = pneg %p33
      %p175 = pneg %p57
      %p176 = pneg %p54
      %p177 = pneg %p78
      %p178 = pneg %p75
      %p179 = pneg %p99
      %p180 = pneg %p96
      %p181 = pneg %p125
      %p182 = pneg %p122
      %p183 = scmp.lt.s32.totalorder %s15, 1
      %s184 = scalar_select %p183, %s15, 1
      %s185 = smul.addr %s184, 2
      %s186 = smul.addr %s185, 8
      %s187 = scalar_lea.vmem %s4, %s186
      %p188 = scmp.lt.s32.totalorder %s15, 1
      %s189 = scalar_select %p188, %s15, 1
      %s190 = smul.addr %s189, 2
      %s191 = smul.addr %s190, 8
      %s192 = scalar_lea.vmem %s0, %s191
      %p193 = scmp.lt.s32.totalorder %s15, 1
      %s194 = scalar_select %p193, %s15, 1
      %s195 = smul.addr %s194, 2
      %s196 = smul.addr %s195, 8
      %s197 = scalar_lea.vmem %s4, %s196
      %v198 = vld [vmem:[%s1] sm:$0xff]
      %v199 = vld [vmem:[%s1 + $0x8] sm:$0xff]
      %v200 = vld [vmem:[%s192] sm:$0xff]
      %v201 = vld [vmem:[%s192 + $0x8] sm:$0xff]
      %vm202 = vcmask 130048
      %v204 = vsel %vm202, %v198, 0
      %v207 = vsel %vm202, %v199, 0
      %209 = vmatprep.subr.mxu0 0.0
      %210 = vmatpush1.msra.mxu0 %v200
      %211 = vmatprep.subr.mxu0 0.0
      %212 = vmatpush1.msra.mxu0 %v201
      %213 = vmatprep.subr.mxu0 0.0
      %214 = vmatpush1.msra.mxu0 0.0
      %215 = vmatprep.subr.mxu0 0.0
      %216 = vmatpush1.msra.mxu0 0.0
      %217 = vmatprep.subr.mxu0 0.0
      %218 = vmatpush1.msra.mxu0 0.0
      %219 = vmatprep.subr.mxu0 0.0
      %220 = vmatpush1.msra.mxu0 0.0
      %221 = vmatprep.subr.mxu0 0.0
      %222 = vmatpush1.msra.mxu0 0.0
      %223 = vmatprep.subr.mxu0 0.0
      %224 = vmatpush1.msra.mxu0 0.0
      %225 = vmatprep.subr.mxu0 0.0
      %226 = vmatpush1.msra.mxu0 0.0
      %227 = vmatprep.subr.mxu0 0.0
      %228 = vmatpush1.msra.mxu0 0.0
      %229 = vmatprep.subr.mxu0 0.0
      %230 = vmatpush1.msra.mxu0 0.0
      %231 = vmatprep.subr.mxu0 0.0
      %232 = vmatpush1.msra.mxu0 0.0
      %233 = vmatprep.subr.mxu0 0.0
      %234 = vmatpush1.msra.mxu0 0.0
      %235 = vmatprep.subr.mxu0 0.0
      %236 = vmatpush1.msra.mxu0 0.0
      %237 = vmatprep.subr.mxu0 0.0
      %238 = vmatpush1.msra.mxu0 0.0
      %239 = vmatprep.subr.mxu0 0.0
      %240 = vmatpush1.msra.mxu0 0.0
      %241 = vmatprep.subr.mxu0 0.0
      %242 = vmatpush1.msra.mxu0 0.0
      %243 = vmatprep.subr.mxu0 0.0
      %244 = vmatpush1.msra.mxu0 0.0
      %245 = vmatprep.subr.mxu0 0.0
      %246 = vmatpush1.msra.mxu0 0.0
      %247 = vmatprep.subr.mxu0 0.0
      %248 = vmatpush1.msra.mxu0 0.0
      %249 = vmatprep.subr.mxu0 0.0
      %250 = vmatpush1.msra.mxu0 0.0
      %251 = vmatprep.subr.mxu0 0.0
      %252 = vmatpush1.msra.mxu0 0.0
      %253 = vmatprep.subr.mxu0 0.0
      %254 = vmatpush1.msra.mxu0 0.0
      %255 = vmatprep.subr.mxu0 0.0
      %256 = vmatpush1.msra.mxu0 0.0
      %257 = vmatprep.subr.mxu0 0.0
      %258 = vmatpush1.msra.mxu0 0.0
      %259 = vmatprep.subr.mxu0 0.0
      %260 = vmatpush1.msra.mxu0 0.0
      %261 = vmatprep.subr.mxu0 0.0
      %262 = vmatpush1.msra.mxu0 0.0
      %263 = vmatprep.subr.mxu0 0.0
      %264 = vmatpush1.msra.mxu0 0.0
      %265 = vmatprep.subr.mxu0 0.0
      %266 = vmatpush1.msra.mxu0 0.0
      %267 = vmatprep.subr.mxu0 0.0
      %268 = vmatpush1.msra.mxu0 0.0
      %269 = vmatprep.subr.mxu0 0.0
      %270 = vmatpush1.msra.mxu0 0.0
      %271 = vmatprep.subr.mxu0 0.0
      %272 = vmatpush1.msra.mxu0 0.0
      %273 = vmatprep.mubr.f32.mxu0 0.0
      %274 = vmatmul.mubr.f32.gmra.mrb[0].mxu0 %v204
      %v275 = vpop.f32.mrb[0].mxu0
      %v276 = vadd.f32 0.0, %v275
      %v277 = vpop.f32.mrb[0].mxu0
      %278 = vmatprep.mubr.f32.mxu0 0.0
      %279 = vmatmul.mubr.f32.gmra.mrb[0].mxu0 %v207
      %v280 = vpop.f32.mrb[0].mxu0
      %v281 = vadd.f32 0.0, %v280
      %v282 = vpop.f32.mrb[0].mxu0
      %283 = vdwg.mxu0
      %v284 = vld [vmem:[%s2] sm:$0xff]
      %v285 = vld [vmem:[%s2 + $0x8] sm:$0xff]
      %287 = vset.pattern.permute.xlu0 0
      %288 = vperm.xlu0 %287, %v284
      %v289 = vpop.permute.xlu0 %288
      %292 = vset.pattern.permute.xlu0 0
      %293 = vperm.xlu0 %292, %v285
      %v294 = vpop.permute.xlu0 %293
      %v296 = vmul.f32 %v276, %v289
      %v297 = vmul.f32 %v281, %v294
      %v298 = vld [vmem:[%s3] sm:$0xff]
      %v299 = vld [vmem:[%s3 + $0x8] sm:$0xff]
      %301 = vset.pattern.permute.xlu0 0
      %302 = vperm.xlu0 %301, %v298
      %v303 = vpop.permute.xlu0 %302
      %306 = vset.pattern.permute.xlu0 0
      %307 = vperm.xlu0 %306, %v299
      %v308 = vpop.permute.xlu0 %307
      %v310 = vadd.f32 %v296, %v303
      %v311 = vadd.f32 %v297, %v308
      %v312 = vmax.f32 %v310, 0.0
      %v313 = vmax.f32 %v311, 0.0
      %v314 = vlaneseq
      %v315 = vshrl.u32 %v314, 7
      %v316 = vadd.s32 %v315, 8
      %v317 = vlaneseq
      %v318 = vand.u32 %v317, 127
      %vm319 = vcmp.ge.s32.totalorder %v315, 4
      %vm320 = vcmp.ge.s32.totalorder %v316, 4
      %v321 = vsel %vm319, 1, 0
      %v322 = vsel %vm320, 1, 0
      %vm323 = vcmp.ge.s32.totalorder %v318, 36
      %v324 = vsel %vm323, 1, 0
      %vm325 = vcmp.ge.s32.totalorder %v315, 8
      %vm326 = vcmp.ge.s32.totalorder %v316, 8
      %v327 = vsel %vm325, 1, 0
      %v328 = vsel %vm326, 1, 0
      %v329 = vadd.s32 %v321, %v327
      %v330 = vadd.s32 %v322, %v328
      %vm331 = vcmp.ge.s32.totalorder %v318, 45
      %v332 = vsel %vm331, 1, 0
      %v333 = vadd.s32 %v324, %v332
      %vm334 = vcmp.ge.s32.totalorder %v315, 12
      %vm335 = vcmp.ge.s32.totalorder %v316, 12
      %v336 = vsel %vm334, 1, 0
      %v337 = vsel %vm335, 1, 0
      %v338 = vadd.s32 %v329, %v336
      %v339 = vadd.s32 %v330, %v337
      %vm340 = vcmp.ge.s32.totalorder %v318, 49
      %v341 = vsel %vm340, 1, 0
      %v342 = vadd.s32 %v333, %v341
      %vm343 = vcmp.eq.s32.totalorder %v338, %v342
      %vm344 = vcmp.eq.s32.totalorder %v339, %v342
      %vm345 = vcmp.lt.s32.totalorder %v318, 50
      %vm346 = vmand %vm343, %vm345
      %vm347 = vmand %vm344, %vm345
      %v348 = vsel %vm346, %v312, 0.0
      %v349 = vsel %vm347, %v313, 0.0
      %vm350 = vcmask 457728
      %351 = vst.msk [vmem:[%s197] sm:$0xff] %vm350, %v348
      %352 = vst.msk [vmem:[%s197 + $0x8] sm:$0xff] %vm350, %v349
      %p353 = scmp.lt.s32.totalorder %s15, 1
      %s354 = scalar_select %p353, %s15, 1
      %s355 = smul.addr %s354, 2
      %s356 = smul.addr %s355, 8
      %s357 = scalar_lea.vmem %s4, %s356
      // Predicated region
      $region37: #{forward.4} parent=35 // pred_check
        %p358 = pneg %p122
      $region38: #{forward.4} parent=35 // pred_check_branch
        %360 = sbr.rel (%p358) target = $region40
      $region39: #{forward.4} parent=35 // pred_region
        _
      $region40: #{forward.4} parent=35 // pred_fallthru
        _
    $region36: #{forward.4} parent=5 // pred_fallthru
      _
    %p361 = scmp.le.s32.totalorder 2, %s10
    // Predicated region
    $region41: #{forward.4} parent=5 // pred_check
      %p362 = pneg %p361
    $region42: #{forward.4} parent=5 // pred_check_branch
      %364 = sbr.rel (%p362) target = $region44
    $region43: #{forward.4} parent=5 // pred_region
      %s365 = ssub.s32 %s10, 2
      // Predicated region
      $region45: #{forward.4} parent=43 // pred_check
        %p366 = pneg %p128
      $region46: #{forward.4} parent=43 // pred_check_branch
        %368 = sbr.rel (%p366) target = $region48
      $region47: #{forward.4} parent=43 // pred_region
        %p369 = scmp.lt.s32.totalorder %s16, 1
        %s370 = scalar_select %p369, %s16, 1
        %s371 = smul.addr %s370, 2
        %s372 = smul.addr %s371, 8
        %s373 = scalar_lea.vmem %s4, %s372
      $region48: #{forward.4} parent=43 // pred_fallthru
        _
    $region44: #{forward.4} parent=5 // pred_fallthru
      _
  $region6: #{forward.4} parent=0 // loop_footer
    %s14 = sadd.s32 1, %s10
  $region7: #{forward.4} parent=0 // loop_footer_branch
    %9 = sbr.rel target = $region3
  $region8: #{forward.4} parent=0 // loop_exit
    _

// kernel: forward.3
$region0: #{forward.3}
  #allocation0 [shape = 'u32[]', space=smem, size = 0x4, offset = 0x4, fixed_abs, tag = 'smem constant byte address 0x4 - core index']
  #allocation1 [shape = 'u32[144,128]{1,0:T(1,128)}', space=vmem, size = 0x12000, scoped, tag = 'internal scratch']
  #allocation2 [shape = 'f32[16,56]{1,0:T(8,128)}', space=vmem, size = 0x2000, scoped, tag = 'scratch operand']
  %s0 = inlined_call_operand.vmem [shape: f32[2,16,256], index: 0, kind: input, shape index: {}]
  %s1 = inlined_call_operand.vmem [shape: f32[256,56], index: 1, kind: input, shape index: {}]
  %s2 = inlined_call_operand.vmem [shape: f32[2,32,256], index: 2, kind: output, shape index: {0}]
  %s3 = inlined_call_operand.vmem [shape: f32[2,16,56], index: 3, kind: output, shape index: {1}]
  %4 = xla_tuple %s2, %s3
  %s5 = sld [smem:[#allocation0]]
  $region129: #{forward.3} parent=0
    _
  %s7 = ssub.s32 1, %s5
  %s8 = scalar_select 0, %s7, %s5
  $region1: #{forward.3} parent=0
    #allocation3 [shape = 'u8[16384]{0}', space=vmem, size = 0x4000, scoped, tag = 'input window, operand 0']
    #allocation4 [shape = 'u8[16384]{0}', space=vmem, size = 0x4000, scoped, tag = 'output window, operand 0']
    loop: start=0, step=1, limit=6
    $region2: #{forward.3} parent=1 // loop_pre_header
      _
    $region3: #{forward.3} parent=1 // loop_header
      %s10 = sphi 0, %s14
      %p11 = scmp.ge.s32.totalorder %s10, 6
      %s17 = sphi 0, %s36
      %s18 = sphi 0, %s32
      %s19 = sphi 0, %s28
      %s20 = sphi 0, %s17
      %s21 = sphi 0, %s18
      %s22 = sphi 0, %s19
      %s23 = sphi 0, %s20
      %s24 = sphi 0, %s21
      %s25 = sphi 0, %s22
      %s43 = sphi 0, %s45
      %s46 = sphi 0, %s43
      %s47 = sphi 0, %s46
      %s63 = sphi 0, %s47
      %s69 = sphi 0, %s71
      %s72 = sphi 0, %s69
      %s73 = sphi 0, %s72
      %s89 = sphi 0, %s73
      %s99 = sphi 0, %s101
      %s102 = sphi 0, %s99
      %s103 = sphi 0, %s102
      %s119 = sphi 0, %s103
      %s127 = sphi 0, %s129
      %s130 = sphi 0, %s127
      %s131 = sphi 0, %s130
      %s147 = sphi 0, %s131
    $region4: #{forward.3} parent=1 // loop_header_branch
      %13 = sbr.rel (%p11) target = $region8
    $region5: #{forward.3} parent=1 // loop_body
      %s15 = ssub.s32 %s10, 1
      %s16 = ssub.s32 %s10, 2
      %s26 = sadd.s32 1, %s19
      %p27 = scmp.ge.s32.totalorder %s26, 2
      %s28 = scalar_select %p27, 0, %s26
      %s29 = sadd.s32 1, %s18
      %s30 = scalar_select %p27, %s29, %s18
      %p31 = scmp.ge.s32.totalorder %s30, 1
      %s32 = scalar_select %p31, 0, %s30
      %s33 = sadd.s32 1, %s17
      %s34 = scalar_select %p31, %s33, %s17
      %p35 = scmp.ge.s32.totalorder %s34, 2
      %s36 = scalar_select %p35, 0, %s34
      %s37 = ssub.s32 %s17, %s36
      %s38 = ssub.s32 %s18, %s32
      %s39 = sor.u32 %s37, %s38
      %s40 = ssub.s32 %s19, %s28
      %s41 = sor.u32 %s39, %s40
      %p42 = scmp.eq.s32.totalorder %s41, 0
      %s44 = sadd.s32 %s43, 1
      %s45 = scalar_select %p42, %s43, %s44
      %p48 = pneg %p42
      %p49 = scmp.eq.s32.totalorder %s10, 3
      %p50 = por %p48, %p49
      %p51 = scmp.ne.s32.totalorder %s43, %s46
      %p52 = scmp.eq.s32.totalorder %s10, 0
      %p53 = por %p51, %p52
      %p54 = scmp.ne.s32.totalorder %s43, %s46
      %p55 = scmp.eq.s32.totalorder %s15, 3
      %p56 = por %p54, %p55
      %p57 = scmp.ne.s32.totalorder %s46, %s47
      %p58 = scmp.eq.s32.totalorder %s15, 0
      %p59 = por %p57, %p58
      %p60 = scmp.ne.s32.totalorder %s46, %s47
      %p61 = scmp.eq.s32.totalorder %s16, 3
      %p62 = por %p60, %p61
      %p64 = scmp.ne.s32.totalorder %s47, %s63
      %p65 = scmp.eq.s32.totalorder %s16, 0
      %p66 = por %p64, %p65
      %s67 = ssub.s32 %s19, %s28
      %p68 = scmp.eq.s32.totalorder %s67, 0
      %s70 = sadd.s32 %s69, 1
      %s71 = scalar_select %p68, %s69, %s70
      %p74 = pneg %p68
      %p75 = scmp.eq.s32.totalorder %s10, 3
      %p76 = por %p74, %p75
      %p77 = scmp.ne.s32.totalorder %s69, %s72
      %p78 = scmp.eq.s32.totalorder %s10, 0
      %p79 = por %p77, %p78
      %p80 = scmp.ne.s32.totalorder %s69, %s72
      %p81 = scmp.eq.s32.totalorder %s15, 3
      %p82 = por %p80, %p81
      %p83 = scmp.ne.s32.totalorder %s72, %s73
      %p84 = scmp.eq.s32.totalorder %s15, 0
      %p85 = por %p83, %p84
      %p86 = scmp.ne.s32.totalorder %s72, %s73
      %p87 = scmp.eq.s32.totalorder %s16, 3
      %p88 = por %p86, %p87
      %p90 = scmp.ne.s32.totalorder %s73, %s89
      %p91 = scmp.eq.s32.totalorder %s16, 0
      %p92 = por %p90, %p91
      %s93 = ssub.s32 %s17, %s36
      %s94 = ssub.s32 %s18, %s32
      %s95 = sor.u32 %s93, %s94
      %s96 = ssub.s32 %s19, %s28
      %s97 = sor.u32 %s95, %s96
      %p98 = scmp.eq.s32.totalorder %s97, 0
      %s100 = sadd.s32 %s99, 1
      %s101 = scalar_select %p98, %s99, %s100
      %p104 = pneg %p98
      %p105 = scmp.eq.s32.totalorder %s10, 3
      %p106 = por %p104, %p105
      %p107 = scmp.ne.s32.totalorder %s99, %s102
      %p108 = scmp.eq.s32.totalorder %s10, 0
      %p109 = por %p107, %p108
      %p110 = scmp.ne.s32.totalorder %s99, %s102
      %p111 = scmp.eq.s32.totalorder %s15, 3
      %p112 = por %p110, %p111
      %p113 = scmp.ne.s32.totalorder %s102, %s103
      %p114 = scmp.eq.s32.totalorder %s15, 0
      %p115 = por %p113, %p114
      %p116 = scmp.ne.s32.totalorder %s102, %s103
      %p117 = scmp.eq.s32.totalorder %s16, 3
      %p118 = por %p116, %p117
      %p120 = scmp.ne.s32.totalorder %s103, %s119
      %p121 = scmp.eq.s32.totalorder %s16, 0
      %p122 = por %p120, %p121
      %s123 = ssub.s32 %s17, %s36
      %s124 = ssub.s32 %s18, %s32
      %s125 = sor.u32 %s123, %s124
      %p126 = scmp.eq.s32.totalorder %s125, 0
      %s128 = sadd.s32 %s127, 1
      %s129 = scalar_select %p126, %s127, %s128
      %p132 = pneg %p126
      %p133 = scmp.eq.s32.totalorder %s10, 3
      %p134 = por %p132, %p133
      %p135 = scmp.ne.s32.totalorder %s127, %s130
      %p136 = scmp.eq.s32.totalorder %s10, 0
      %p137 = por %p135, %p136
      %p138 = scmp.ne.s32.totalorder %s127, %s130
      %p139 = scmp.eq.s32.totalorder %s15, 3
      %p140 = por %p138, %p139
      %p141 = scmp.ne.s32.totalorder %s130, %s131
      %p142 = scmp.eq.s32.totalorder %s15, 0
      %p143 = por %p141, %p142
      %p144 = scmp.ne.s32.totalorder %s130, %s131
      %p145 = scmp.eq.s32.totalorder %s16, 3
      %p146 = por %p144, %p145
      %p148 = scmp.ne.s32.totalorder %s131, %s147
      %p149 = scmp.eq.s32.totalorder %s16, 0
      %p150 = por %p148, %p149
      %p151 = scmp.le.s32.totalorder 1, %s10
      %p152 = scmp.lt.s32.totalorder %s10, 5
      %p153 = pnand %p151, %p152
      %p154 = pneg %p153
      // Predicated region
      $region9: #{forward.3} parent=5 // pred_check
        _
      $region10: #{forward.3} parent=5 // pred_check_branch
        %156 = sbr.rel (%p153) target = $region12
      $region11: #{forward.3} parent=5 // pred_region
        %s157 = ssub.s32 %s10, 1
      $region12: #{forward.3} parent=5 // pred_fallthru
        _
      %p158 = scmp.lt.s32.totalorder %s10, 4
      // Predicated region
      $region13: #{forward.3} parent=5 // pred_check
        %p159 = pneg %p158
      $region14: #{forward.3} parent=5 // pred_check_branch
        %161 = sbr.rel (%p159) target = $region16
      $region15: #{forward.3} parent=5 // pred_region
        // Predicated region
        $region17: #{forward.3} parent=15 // pred_check
          %p162 = pneg %p53
        $region18: #{forward.3} parent=15 // pred_check_branch
          %164 = sbr.rel (%p162) target = $region20
        $region19: #{forward.3} parent=15 // pred_region
          %s165 = sand.u32 %s43, 1
          %s166 = sand.u32 %s43, 1
          %s167 = smul.addr %s166, 16
          %s168 = scalar_lea.vmem [#allocation3], %s167
          %s169 = smul.u32 2, %s18
          %s170 = smul.addr %s169, 2
          %s171 = sadd.s32 %s19, %s170
          %s172 = smul.addr %s17, 4
          %s173 = sadd.s32 %s171, %s172
          %s174 = smul.addr %s173, 8
          %s175 = scalar_lea.vmem %s0, %s174
          // Predicated region
          $region21: #{forward.3} parent=19 // pred_check
            _
          $region22: #{forward.3} parent=19 // pred_check_branch
            %177 = sbr.rel (0) target = $region24
          $region23: #{forward.3} parent=19 // pred_region
            // Predicated region
            $region25: #{forward.3} parent=23 // pred_check
              _
            $region26: #{forward.3} parent=23 // pred_check_branch
              %179 = sbr.rel (0) target = $region28
            $region27: #{forward.3} parent=23 // pred_region
              // Predicated region
              $region40: #{forward.3} parent=27 // pred_check
                _
              $region41: #{forward.3} parent=27 // pred_check_branch
                %196 = sbr.rel (0) target = $region43
              $region42: #{forward.3} parent=27 // pred_region
                loop: start=0, step=1, limit=1
                $region44: #{forward.3} parent=42 // loop_pre_header
                  _
                $region45: #{forward.3} parent=42 // loop_header
                  %s198 = sphi 0, %s202
                  %p199 = scmp.ge.s32.totalorder %s198, 1
                  %s203 = sphi %s175, %s175
                  %s204 = sphi %s168, %s168
                $region46: #{forward.3} parent=42 // loop_header_branch
                  %201 = sbr.rel (%p199) target = $region50
                $region47: #{forward.3} parent=42 // loop_body
                  %v205 = vld [vmem:[%s203] sm:$0xff]
                  %206 = vst [vmem:[%s204] sm:$0xff] %v205
                  %v207 = vld [vmem:[%s203 + $0x10] sm:$0xff]
                  %208 = vst [vmem:[%s204 + $0x8] sm:$0xff] %v207
                $region48: #{forward.3} parent=42 // loop_footer
                  %s202 = sadd.s32 1, %s198
                $region49: #{forward.3} parent=42 // loop_footer_branch
                  %197 = sbr.rel target = $region45
                $region50: #{forward.3} parent=42 // loop_exit
                  _
              $region43: #{forward.3} parent=27 // pred_fallthru
                _
              // Predicated region
              $region51: #{forward.3} parent=27 // pred_check
                _
              $region52: #{forward.3} parent=27 // pred_check_branch
                %210 = sbr.rel target = $region54
              $region53: #{forward.3} parent=27 // pred_region
                _
              $region54: #{forward.3} parent=27 // pred_fallthru
                _
            $region28: #{forward.3} parent=23 // pred_fallthru
              _
            // Predicated region
            $region29: #{forward.3} parent=23 // pred_check
              _
            $region30: #{forward.3} parent=23 // pred_check_branch
              %181 = sbr.rel target = $region32
            $region31: #{forward.3} parent=23 // pred_region
              loop: start=0, step=1, limit=1
              $region33: #{forward.3} parent=31 // loop_pre_header
                _
              $region34: #{forward.3} parent=31 // loop_header
                %s184 = sphi 0, %s188
                %p185 = scmp.ge.s32.totalorder %s184, 1
                %s189 = sphi %s175, %s175
                %s190 = sphi %s168, %s168
              $region35: #{forward.3} parent=31 // loop_header_branch
                %187 = sbr.rel (%p185) target = $region39
              $region36: #{forward.3} parent=31 // loop_body
                %v191 = vld [vmem:[%s189] sm:$0xff]
                %192 = vst [vmem:[%s190] sm:$0xff] %v191
                %v193 = vld [vmem:[%s189 + $0x10] sm:$0xff]
                %194 = vst [vmem:[%s190 + $0x8] sm:$0xff] %v193
              $region37: #{forward.3} parent=31 // loop_footer
                %s188 = sadd.s32 1, %s184
              $region38: #{forward.3} parent=31 // loop_footer_branch
                %183 = sbr.rel target = $region34
              $region39: #{forward.3} parent=31 // loop_exit
                _
            $region32: #{forward.3} parent=23 // pred_fallthru
              _
          $region24: #{forward.3} parent=19 // pred_fallthru
            _
          %211 = vnop
        $region20: #{forward.3} parent=15 // pred_fallthru
          _
        // Predicated region
        $region55: #{forward.3} parent=15 // pred_check
          %p212 = pneg %p79
        $region56: #{forward.3} parent=15 // pred_check_branch
          %214 = sbr.rel (%p212) target = $region58
        $region57: #{forward.3} parent=15 // pred_region
          %s215 = smul.u32 16, %s19
          %p216 = scmp.lt.s32.totalorder %s215, 31
          %s217 = scalar_select %p216, %s215, 31
          %s218 = smul.addr %s217, 8
          %s219 = scalar_lea.vmem %s1, %s218
          %s220 = smul.u32 16, %s19
        $region58: #{forward.3} parent=15 // pred_fallthru
          _
      $region16: #{forward.3} parent=5 // pred_fallthru
        _
      %p221 = scmp.le.s32.totalorder 1, %s10
      %p222 = scmp.lt.s32.totalorder %s10, 5
      %p223 = pnand %p221, %p222
      %p224 = pneg %p223
      // Predicated region
      $region59: #{forward.3} parent=5 // pred_check
        _
      $region60: #{forward.3} parent=5 // pred_check_branch
        %226 = sbr.rel (%p223) target = $region62
      $region61: #{forward.3} parent=5 // pred_region
        %s227 = ssub.s32 %s10, 1
        %s228 = sand.u32 %s46, 1
        %s229 = sand.u32 %s46, 1
        %s230 = smul.addr %s229, 16
        %s231 = scalar_lea.vmem [#allocation3], %s230
        // Predicated region
        $region63: #{forward.3} parent=61 // pred_check
          %p232 = pneg %p59
        $region64: #{forward.3} parent=61 // pred_check_branch
          %234 = sbr.rel (%p232) target = $region66
        $region65: #{forward.3} parent=61 // pred_region
          _
        $region66: #{forward.3} parent=61 // pred_fallthru
          _
        %s235 = sand.u32 %s46, 1
        %s236 = sand.u32 %s46, 1
        %s237 = smul.addr %s236, 16
        %s238 = scalar_lea.vmem [#allocation3], %s237
        %p239 = pneg %p59
        %p240 = pneg %p56
        %s241 = smul.u32 16, %s22
        %p242 = scmp.lt.s32.totalorder %s241, 31
        %s243 = scalar_select %p242, %s241, 31
        %s244 = smul.addr %s243, 8
        %s245 = scalar_lea.vmem %s1, %s244
        %p246 = pneg %p85
        %p247 = pneg %p82
        %p248 = pneg %p115
        %p249 = pneg %p112
        %s250 = sand.u32 %s102, 1
        %s251 = sand.u32 %s102, 1
        %s252 = smul.addr %s251, 16
        %s253 = scalar_lea.vmem [#allocation4], %s252
        %p254 = pneg %p143
        %p255 = pneg %p140
        %s256 = smul.u32 2, %s21
        %p257 = scmp.lt.s32.totalorder %s20, 1
        %s258 = scalar_select %p257, %s20, 1
        %p259 = scmp.lt.s32.totalorder %s256, 1
        %s260 = scalar_select %p259, %s256, 1
        %s261 = smul.addr %s258, 2
        %s262 = sadd.s32 %s260, %s261
        %s263 = smul.addr %s262, 8
        %s264 = scalar_lea.vmem %s3, %s263
        %s265 = smul.u32 2, %s21
        %s266 = smul.u32 16, %s22
        %p267 = scmp.lt.s32.totalorder %s266, 31
        %s268 = scalar_select %p267, %s266, 31
        %s269 = smul.addr %s268, 8
        %s270 = scalar_lea.vmem %s1, %s269
        %s271 = smul.u32 16, %s22
        %s272 = smul.u32 2, %s21
        %s273 = smul.u32 2, %s21
        %p274 = scmp.lt.s32.totalorder %s20, 1
        %s275 = scalar_select %p274, %s20, 1
        %p276 = scmp.lt.s32.totalorder %s273, 1
        %s277 = scalar_select %p276, %s273, 1
        %s278 = smul.addr %s275, 2
        %s279 = sadd.s32 %s277, %s278
        %s280 = smul.addr %s279, 8
        %s281 = scalar_lea.vmem %s3, %s280
        %s282 = smul.u32 2, %s21
        %p283 = scmp.eq.s32.totalorder %s22, 0
        // Predicated region
        $region67: #{forward.3} parent=61 // pred_check
          %p284 = pneg %p283
        $region68: #{forward.3} parent=61 // pred_check_branch
          %286 = sbr.rel (%p284) target = $region70
        $region69: #{forward.3} parent=61 // pred_region
          %vm287 = vcmask 457728
          %288 = vst.msk [vmem:[#allocation2] sm:$0xff] %vm287, 0.0
          %289 = vst.msk [vmem:[#allocation2 + $0x8] sm:$0xff] %vm287, 0.0
        $region70: #{forward.3} parent=61 // pred_fallthru
          _
        %v290 = vld [vmem:[%s231] sm:$0xff]
        %v291 = vld [vmem:[%s231 + $0x8] sm:$0xff]
        %292 = vst [vmem:[%s253] sm:$0xff] %v290
        %293 = vst [vmem:[%s253 + $0x8] sm:$0xff] %v291
        %v294 = vld [vmem:[#allocation2] sm:$0xff]
        %v295 = vld [vmem:[#allocation2 + $0x8] sm:$0xff]
        %v296 = vld [vmem:[%s270] sm:$0xff]
        %v297 = vld [vmem:[%s270 + $0x8] sm:$0xff]
        %v298 = vld [vmem:[%s270 + $0x10] sm:$0xff]
        %v299 = vld [vmem:[%s270 + $0x18] sm:$0xff]
        %v300 = vld [vmem:[%s270 + $0x20] sm:$0xff]
        %v301 = vld [vmem:[%s270 + $0x28] sm:$0xff]
        %v302 = vld [vmem:[%s270 + $0x30] sm:$0xff]
        %v303 = vld [vmem:[%s270 + $0x38] sm:$0xff]
        %v304 = vld [vmem:[%s270 + $0x40] sm:$0xff]
        %v305 = vld [vmem:[%s270 + $0x48] sm:$0xff]
        %v306 = vld [vmem:[%s270 + $0x50] sm:$0xff]
        %v307 = vld [vmem:[%s270 + $0x58] sm:$0xff]
        %v308 = vld [vmem:[%s270 + $0x60] sm:$0xff]
        %v309 = vld [vmem:[%s270 + $0x68] sm:$0xff]
        %v310 = vld [vmem:[%s270 + $0x70] sm:$0xff]
        %v311 = vld [vmem:[%s270 + $0x78] sm:$0xff]
        %312 = vmatprep.subr.mxu0 0.0
        %313 = vmatpush1.msra.mxu0 %v296
        %314 = vmatprep.subr.mxu0 0.0
        %315 = vmatpush1.msra.mxu0 %v297
        %316 = vmatprep.subr.mxu0 0.0
        %317 = vmatpush1.msra.mxu0 %v298
        %318 = vmatprep.subr.mxu0 0.0
        %319 = vmatpush1.msra.mxu0 %v299
        %320 = vmatprep.subr.mxu0 0.0
        %321 = vmatpush1.msra.mxu0 %v300
        %322 = vmatprep.subr.mxu0 0.0
        %323 = vmatpush1.msra.mxu0 %v301
        %324 = vmatprep.subr.mxu0 0.0
        %325 = vmatpush1.msra.mxu0 %v302
        %326 = vmatprep.subr.mxu0 0.0
        %327 = vmatpush1.msra.mxu0 %v303
        %328 = vmatprep.subr.mxu0 0.0
        %329 = vmatpush1.msra.mxu0 %v304
        %330 = vmatprep.subr.mxu0 0.0
        %331 = vmatpush1.msra.mxu0 %v305
        %332 = vmatprep.subr.mxu0 0.0
        %333 = vmatpush1.msra.mxu0 %v306
        %334 = vmatprep.subr.mxu0 0.0
        %335 = vmatpush1.msra.mxu0 %v307
        %336 = vmatprep.subr.mxu0 0.0
        %337 = vmatpush1.msra.mxu0 %v308
        %338 = vmatprep.subr.mxu0 0.0
        %339 = vmatpush1.msra.mxu0 %v309
        %340 = vmatprep.subr.mxu0 0.0
        %341 = vmatpush1.msra.mxu0 %v310
        %342 = vmatprep.subr.mxu0 0.0
        %343 = vmatpush1.msra.mxu0 %v311
        %344 = vmatprep.subr.mxu0 0.0
        %345 = vmatpush1.msra.mxu0 0.0
        %346 = vmatprep.subr.mxu0 0.0
        %347 = vmatpush1.msra.mxu0 0.0
        %348 = vmatprep.subr.mxu0 0.0
        %349 = vmatpush1.msra.mxu0 0.0
        %350 = vmatprep.subr.mxu0 0.0
        %351 = vmatpush1.msra.mxu0 0.0
        %352 = vmatprep.subr.mxu0 0.0
        %353 = vmatpush1.msra.mxu0 0.0
        %354 = vmatprep.subr.mxu0 0.0
        %355 = vmatpush1.msra.mxu0 0.0
        %356 = vmatprep.subr.mxu0 0.0
        %357 = vmatpush1.msra.mxu0 0.0
        %358 = vmatprep.subr.mxu0 0.0
        %359 = vmatpush1.msra.mxu0 0.0
        %360 = vmatprep.subr.mxu0 0.0
        %361 = vmatpush1.msra.mxu0 0.0
        %362 = vmatprep.subr.mxu0 0.0
        %363 = vmatpush1.msra.mxu0 0.0
        %364 = vmatprep.subr.mxu0 0.0
        %365 = vmatpush1.msra.mxu0 0.0
        %366 = vmatprep.subr.mxu0 0.0
        %367 = vmatpush1.msra.mxu0 0.0
        %368 = vmatprep.subr.mxu0 0.0
        %369 = vmatpush1.msra.mxu0 0.0
        %370 = vmatprep.subr.mxu0 0.0
        %371 = vmatpush1.msra.mxu0 0.0
        %372 = vmatprep.subr.mxu0 0.0
        %373 = vmatpush1.msra.mxu0 0.0
        %374 = vmatprep.subr.mxu0 0.0
        %375 = vmatpush1.msra.mxu0 0.0
        %376 = vmatprep.mubr.f32.mxu0 0.0
        %377 = vmatmul.mubr.f32.gmra.mrb[0].mxu0 %v290
        %v378 = vpop.f32.mrb[0].mxu0
        %v379 = vadd.f32 0.0, %v378
        %v380 = vpop.f32.mrb[0].mxu0
        %381 = vmatprep.mubr.f32.mxu0 0.0
        %382 = vmatmul.mubr.f32.gmra.mrb[0].mxu0 %v291
        %v383 = vpop.f32.mrb[0].mxu0
        %v384 = vadd.f32 0.0, %v383
        %v385 = vpop.f32.mrb[0].mxu0
        %386 = vdwg.mxu0
        %v387 = vadd.f32 %v294, %v379
        %v388 = vadd.f32 %v295, %v384
        %vm389 = vcmask 457728
        %390 = vst.msk [vmem:[#allocation2] sm:$0xff] %vm389, %v387
        %391 = vst.msk [vmem:[#allocation2 + $0x8] sm:$0xff] %vm389, %v388
        %p392 = scmp.eq.s32.totalorder %s22, 1
        // Predicated region
        $region71: #{forward.3} parent=61 // pred_check
          %p393 = pneg %p392
        $region72: #{forward.3} parent=61 // pred_check_branch
          %395 = sbr.rel (%p393) target = $region74
        $region73: #{forward.3} parent=61 // pred_region
          %v396 = vld [vmem:[#allocation2] sm:$0xff]
          %v397 = vld [vmem:[#allocation2 + $0x8] sm:$0xff]
          %398 = vst.msk [vmem:[%s281] sm:$0xff] %vm389, %v396
          %399 = vst.msk [vmem:[%s281 + $0x8] sm:$0xff] %vm389, %v397
        $region74: #{forward.3} parent=61 // pred_fallthru
          _
        %s400 = sand.u32 %s102, 1
        %s401 = sand.u32 %s102, 1
        %s402 = smul.addr %s401, 16
        %s403 = scalar_lea.vmem [#allocation4], %s402
        %s404 = smul.u32 2, %s21
        %p405 = scmp.lt.s32.totalorder %s20, 1
        %s406 = scalar_select %p405, %s20, 1
        %p407 = scmp.lt.s32.totalorder %s404, 1
        %s408 = scalar_select %p407, %s404, 1
        %s409 = smul.addr %s406, 2
        %s410 = sadd.s32 %s408, %s409
        %s411 = smul.addr %s410, 8
        %s412 = scalar_lea.vmem %s3, %s411
        // Predicated region
        $region75: #{forward.3} parent=61 // pred_check
          %p413 = pneg %p112
        $region76: #{forward.3} parent=61 // pred_check_branch
          %415 = sbr.rel (%p413) target = $region78
        $region77: #{forward.3} parent=61 // pred_region
          %s416 = smul.u32 2, %s21
          %s417 = smul.addr %s416, 2
          %s418 = sadd.s32 %s22, %s417
          %s419 = smul.addr %s20, 8
          %s420 = sadd.s32 %s418, %s419
          %s421 = smul.addr %s420, 8
          %s422 = scalar_lea.vmem %s2, %s421
          // Predicated region
          $region79: #{forward.3} parent=77 // pred_check
            _
          $region80: #{forward.3} parent=77 // pred_check_branch
            %424 = sbr.rel (0) target = $region82
          $region81: #{forward.3} parent=77 // pred_region
            // Predicated region
            $region83: #{forward.3} parent=81 // pred_check
              _
            $region84: #{forward.3} parent=81 // pred_check_branch
              %426 = sbr.rel (0) target = $region86
            $region85: #{forward.3} parent=81 // pred_region
              // Predicated region
              $region98: #{forward.3} parent=85 // pred_check
                _
              $region99: #{forward.3} parent=85 // pred_check_branch
                %443 = sbr.rel (0) target = $region101
              $region100: #{forward.3} parent=85 // pred_region
                loop: start=0, step=1, limit=1
                $region102: #{forward.3} parent=100 // loop_pre_header
                  _
                $region103: #{forward.3} parent=100 // loop_header
                  %s445 = sphi 0, %s449
                  %p446 = scmp.ge.s32.totalorder %s445, 1
                  %s450 = sphi %s403, %s403
                  %s451 = sphi %s422, %s422
                $region104: #{forward.3} parent=100 // loop_header_branch
                  %448 = sbr.rel (%p446) target = $region108
                $region105: #{forward.3} parent=100 // loop_body
                  %v452 = vld [vmem:[%s450] sm:$0xff]
                  %453 = vst [vmem:[%s451] sm:$0xff] %v452
                  %v454 = vld [vmem:[%s450 + $0x8] sm:$0xff]
                  %455 = vst [vmem:[%s451 + $0x10] sm:$0xff] %v454
                $region106: #{forward.3} parent=100 // loop_footer
                  %s449 = sadd.s32 1, %s445
                $region107: #{forward.3} parent=100 // loop_footer_branch
                  %444 = sbr.rel target = $region103
                $region108: #{forward.3} parent=100 // loop_exit
                  _
              $region101: #{forward.3} parent=85 // pred_fallthru
                _
              // Predicated region
              $region109: #{forward.3} parent=85 // pred_check
                _
              $region110: #{forward.3} parent=85 // pred_check_branch
                %457 = sbr.rel target = $region112
              $region111: #{forward.3} parent=85 // pred_region
                _
              $region112: #{forward.3} parent=85 // pred_fallthru
                _
            $region86: #{forward.3} parent=81 // pred_fallthru
              _
            // Predicated region
            $region87: #{forward.3} parent=81 // pred_check
              _
            $region88: #{forward.3} parent=81 // pred_check_branch
              %428 = sbr.rel target = $region90
            $region89: #{forward.3} parent=81 // pred_region
              loop: start=0, step=1, limit=1
              $region91: #{forward.3} parent=89 // loop_pre_header
                _
              $region92: #{forward.3} parent=89 // loop_header
                %s431 = sphi 0, %s435
                %p432 = scmp.ge.s32.totalorder %s431, 1
                %s436 = sphi %s403, %s403
                %s437 = sphi %s422, %s422
              $region93: #{forward.3} parent=89 // loop_header_branch
                %434 = sbr.rel (%p432) target = $region97
              $region94: #{forward.3} parent=89 // loop_body
                %v438 = vld [vmem:[%s436] sm:$0xff]
                %439 = vst [vmem:[%s437] sm:$0xff] %v438
                %v440 = vld [vmem:[%s436 + $0x8] sm:$0xff]
                %441 = vst [vmem:[%s437 + $0x10] sm:$0xff] %v440
              $region95: #{forward.3} parent=89 // loop_footer
                %s435 = sadd.s32 1, %s431
              $region96: #{forward.3} parent=89 // loop_footer_branch
                %430 = sbr.rel target = $region92
              $region97: #{forward.3} parent=89 // loop_exit
                _
            $region90: #{forward.3} parent=81 // pred_fallthru
              _
          $region82: #{forward.3} parent=77 // pred_fallthru
            _
          %458 = vnop
        $region78: #{forward.3} parent=61 // pred_fallthru
          _
        // Predicated region
        $region113: #{forward.3} parent=61 // pred_check
          %p459 = pneg %p140
        $region114: #{forward.3} parent=61 // pred_check_branch
          %461 = sbr.rel (%p459) target = $region116
        $region115: #{forward.3} parent=61 // pred_region
          %s462 = smul.u32 2, %s21
        $region116: #{forward.3} parent=61 // pred_fallthru
          _
      $region62: #{forward.3} parent=5 // pred_fallthru
        _
      %p463 = scmp.le.s32.totalorder 2, %s10
      // Predicated region
      $region117: #{forward.3} parent=5 // pred_check
        %p464 = pneg %p463
      $region118: #{forward.3} parent=5 // pred_check_branch
        %466 = sbr.rel (%p464) target = $region120
      $region119: #{forward.3} parent=5 // pred_region
        %s467 = ssub.s32 %s10, 2
        // Predicated region
        $region121: #{forward.3} parent=119 // pred_check
          %p468 = pneg %p118
        $region122: #{forward.3} parent=119 // pred_check_branch
          %470 = sbr.rel (%p468) target = $region124
        $region123: #{forward.3} parent=119 // pred_region
          %s471 = sand.u32 %s103, 1
          %s472 = sand.u32 %s103, 1
          %s473 = smul.addr %s472, 16
          %s474 = scalar_lea.vmem [#allocation4], %s473
        $region124: #{forward.3} parent=119 // pred_fallthru
          _
        // Predicated region
        $region125: #{forward.3} parent=119 // pred_check
          %p475 = pneg %p146
        $region126: #{forward.3} parent=119 // pred_check_branch
          %477 = sbr.rel (%p475) target = $region128
        $region127: #{forward.3} parent=119 // pred_region
          %s478 = smul.u32 2, %s24
          %p479 = scmp.lt.s32.totalorder %s23, 1
          %s480 = scalar_select %p479, %s23, 1
          %p481 = scmp.lt.s32.totalorder %s478, 1
          %s482 = scalar_select %p481, %s478, 1
          %s483 = smul.addr %s480, 2
          %s484 = sadd.s32 %s482, %s483
          %s485 = smul.addr %s484, 8
          %s486 = scalar_lea.vmem %s3, %s485
        $region128: #{forward.3} parent=119 // pred_fallthru
          _
      $region120: #{forward.3} parent=5 // pred_fallthru
        _
    $region6: #{forward.3} parent=1 // loop_footer
      %s14 = sadd.s32 1, %s10
    $region7: #{forward.3} parent=1 // loop_footer_branch
      %9 = sbr.rel target = $region3
    $region8: #{forward.3} parent=1 // loop_exit
      _

</llo_original>
